<compile_context>
chip_gen: v7x
topology: tpu7x:2x2x1
jax: 0.10.0
libtpu: 0.0.40
codegen_flags: <defaults>
</compile_context>

<pallas_src>
import functools

import jax
import jax.numpy as jnp
from jax.experimental import pallas as pl
from jax.experimental.pallas import tpu as pltpu


def _wsconv_kernel(x_ref, w_ref, b_ref, o_ref, *, kh, kw, cin, wo, row_tile, k_pad):
    """One (batch, row-band) tile of the conv as a single MXU matmul.

    x_ref: (1, Hp, Wp, Cin)            padded input image for this batch element (bf16)
    w_ref: (K_pad, Cout_pad)           scale-folded, flattened, zero-padded weights (bf16)
    b_ref: (1, Cout_pad)               bias, zero-padded to the lane width (f32)
    o_ref: (1, row_tile*Wo, Cout_pad)  lane-dense output row band (f32)
    """
    k = kh * kw * cin
    row0 = pl.multiple_of(pl.program_id(1) * row_tile, row_tile)

    # im2col for this row band: one full-width load per kernel row (sublane offset
    # only), kw shifts as value-level slices, concatenated so the contraction dim
    # is K = kh*kw*Cin -> one big MXU matmul instead of kh*kw tiny (K=Cin) ones.
    cols = []
    for i in range(kh):
        band = x_ref[0, pl.ds(row0 + i, row_tile), :, :]        # (row_tile, Wp, Cin)
        for j in range(kw):
            cols.append(band[:, j:j + wo, :])                   # (row_tile, Wo, Cin)
    if k_pad > k:  # pad K up to the sublane tile so the weight load is unmasked
        cols.append(jnp.zeros((row_tile, wo, k_pad - k), dtype=cols[0].dtype))
    patches = jnp.concatenate(cols, axis=-1)                    # (row_tile, Wo, K_pad)
    patches = patches.reshape(row_tile * wo, k_pad)             # (M, K_pad)

    acc = jnp.dot(patches, w_ref[...],                          # (M, Cout_pad) f32 acc
                  preferred_element_type=jnp.float32)
    acc = acc + b_ref[...]                                       # f32 bias, broadcast over M
    o_ref[0] = acc.astype(o_ref.dtype)


def _tiled_vmem_bytes(shape, dtype):
    """Rough VMEM footprint of one block buffer (minor dims padded to native tiles)."""
    itemsize = jnp.dtype(dtype).itemsize
    sublane = {4: 8, 2: 16, 1: 32}.get(itemsize, 8)
    if len(shape) >= 2:
        lead = 1
        for d in shape[:-2]:
            lead *= int(d)
        s, l = int(shape[-2]), int(shape[-1])
    else:
        lead, s, l = 1, 1, int(shape[0])
    s_p = -(-s // sublane) * sublane
    l_p = -(-l // 128) * 128
    return lead * s_p * l_p * itemsize


def _vmem_capacity_bytes():
    try:
        return int(pltpu.get_tpu_info().vmem_capacity_bytes)
    except Exception:
        return 64 * 1024 * 1024  # v7x per-TensorCore VMEM; safe lower bound


def wsconv2d(x_nchw, weight_oihw, bias, *, stride=1, padding=1, gain=2,
             compute_dtype=jnp.bfloat16, row_tile=None):
    """x_nchw: (N, Cin, H, W). weight_oihw: (Cout, Cin, kh, kw). bias: (Cout,)."""
    assert stride == 1, "this kernel implements the module's default stride=1"
    N, Cin, H, W = x_nchw.shape
    Cout, _, kh, kw = weight_oihw.shape
    scale = (gain / (Cin * kh * kw)) ** 0.5

    Ho = H + 2 * padding - kh + 1
    Wo = W + 2 * padding - kw + 1
    LANE = 128
    Cout_p = -(-Cout // LANE) * LANE                    # lane-dense output channels

    K = kh * kw * Cin
    k_mult = 16 if jnp.dtype(compute_dtype).itemsize == 2 else 8
    K_pad = -(-K // k_mult) * k_mult

    # ---- layout glue (each direction fuses into a single XLA pass) ----------
    x_nhwc = jnp.transpose(x_nchw, (0, 2, 3, 1))        # (N, H, W, Cin)
    x_pad = jnp.pad(
        x_nhwc, ((0, 0), (padding, padding), (padding, padding), (0, 0)))
    x_pad = x_pad.astype(compute_dtype)
    Hp, Wp = H + 2 * padding, W + 2 * padding

    # Fold the WS scale into the tiny weights; HWIO -> (K, Cout), pad K and Cout.
    w_hwio = jnp.transpose(weight_oihw, (2, 3, 1, 0)).astype(jnp.float32) * scale
    w_flat = w_hwio.reshape(K, Cout).astype(compute_dtype)
    w_padded = jnp.pad(w_flat, ((0, K_pad - K), (0, Cout_p - Cout)))
    b_padded = jnp.pad(bias.astype(jnp.float32), (0, Cout_p - Cout)).reshape(1, Cout_p)

    # ---- row-band size from a per-generation VMEM budget ---------------------
    in_block = _tiled_vmem_bytes((1, Hp, Wp, Cin), compute_dtype)
    fixed = (2 * in_block
             + 2 * _tiled_vmem_bytes((K_pad, Cout_p), compute_dtype)
             + 2 * _tiled_vmem_bytes((1, Cout_p), jnp.float32))
    vmem_cap = _vmem_capacity_bytes()
    budget = int(0.7 * vmem_cap)
    if row_tile is None:
        for cand in sorted((d for d in range(1, Ho + 1) if Ho % d == 0), reverse=True):
            if (cand * Wo) % 8 != 0 and cand != Ho:
                continue
            demand = fixed + 2 * _tiled_vmem_bytes((1, cand * Wo, Cout_p), jnp.float32)
            if demand <= budget:
                row_tile = cand
                break
        if row_tile is None:
            row_tile = 1  # TODO(synk): switch to the manual halo-DMA path for huge images
    assert Ho % row_tile == 0, "row_tile must divide the output height"

    demand = fixed + 2 * _tiled_vmem_bytes((1, row_tile * Wo, Cout_p), jnp.float32)
    vmem_limit = int(min(int(0.9 * vmem_cap), max(2 * demand, 32 * 1024 * 1024)))

    kernel = functools.partial(_wsconv_kernel, kh=kh, kw=kw, cin=Cin, wo=Wo,
                               row_tile=row_tile, k_pad=K_pad)

    out = pl.pallas_call(
        kernel,
        out_shape=jax.ShapeDtypeStruct((N, Ho * Wo, Cout_p), jnp.float32),
        grid_spec=pltpu.PrefetchScalarGridSpec(
            num_scalar_prefetch=0,
            grid=(N, Ho // row_tile),
            in_specs=[
                # Whole padded image per batch element, resident across its row bands.
                pl.BlockSpec((1, Hp, Wp, Cin), lambda n, t: (n, 0, 0, 0)),
                # Tiny weight / bias, constant across the whole grid.
                pl.BlockSpec((K_pad, Cout_p), lambda n, t: (0, 0)),
                pl.BlockSpec((1, Cout_p), lambda n, t: (0, 0)),
            ],
            out_specs=pl.BlockSpec(
                (1, row_tile * Wo, Cout_p), lambda n, t: (n, t, 0)),
        ),
        compiler_params=pltpu.CompilerParams(
            dimension_semantics=("parallel", "arbitrary"),
            vmem_limit_bytes=vmem_limit,
        ),
    )(x_pad, w_padded, b_padded)

    # Drop the lane padding and return NCHW like the PyTorch module.
    out = out.reshape(N, Ho, Wo, Cout_p)[..., :Cout]
    return jnp.transpose(out, (0, 3, 1, 2))


if __name__ == "__main__":
    key = jax.random.PRNGKey(0)
    kx, kw_key = jax.random.split(key)

    N, Cin, H, W = 2, 4, 16, 16
    Cout, ksize, stride, padding, gain = 8, 3, 1, 1, 2

    x = jax.random.normal(kx, (N, Cin, H, W), dtype=jnp.float32)
    # Deterministic parameter init mirroring the PyTorch __init__:
    weight = jax.random.normal(kw_key, (Cout, Cin, ksize, ksize), dtype=jnp.float32)
    bias = jnp.zeros((Cout,), dtype=jnp.float32)

    out = wsconv2d(x, weight, bias, stride=stride, padding=padding, gain=gain)
    out = jax.block_until_ready(out)
    assert out.shape == (N, Cout, H, W)

    scale = (gain / (Cin * ksize * ksize)) ** 0.5

    # Tight check against a reference with the SAME bf16 operand rounding
    # (f32 accumulation both ways) -> isolates kernel correctness.
    x_q = x.astype(jnp.bfloat16).astype(jnp.float32)
    w_q = (weight * scale).astype(jnp.bfloat16).astype(jnp.float32)
    ref_q = jax.lax.conv_general_dilated(
        x_q, w_q, window_strides=(stride, stride),
        padding=((padding, padding), (padding, padding)),
        dimension_numbers=("NCHW", "OIHW", "NCHW"),
    ) + bias.reshape(1, Cout, 1, 1)
    err_q = float(jnp.max(jnp.abs(out - ref_q)))
    assert jnp.allclose(out, ref_q, atol=1e-3, rtol=1e-3), err_q

    # Loose sanity check against the exact-f32 module semantics (bf16 operands
    # introduce ~0.5% rounding, well inside this tolerance).
    ref_f32 = jax.lax.conv_general_dilated(
        x * scale, weight, window_strides=(stride, stride),
        padding=((padding, padding), (padding, padding)),
        dimension_numbers=("NCHW", "OIHW", "NCHW"),
    ) + bias.reshape(1, Cout, 1, 1)
    err_f32 = float(jnp.max(jnp.abs(out - ref_f32)))
    assert jnp.allclose(out, ref_f32, atol=1e-1, rtol=1e-1), err_f32

    print("KERNEL_OK")
</pallas_src>

<mosaic_0001>
module attributes {stable_mosaic.version = 11 : i64} {
  func.func @_wsconv_kernel(%arg0: i32, %arg1: i32, %arg2: memref<1x18x18x4xbf16, #tpu.memory_space<vmem>>, %arg3: memref<48x128xbf16, #tpu.memory_space<vmem>>, %arg4: memref<1x128xf32, #tpu.memory_space<vmem>>, %arg5: memref<1x256x128xf32, #tpu.memory_space<vmem>>) attributes {dimension_semantics = [#tpu.dimension_semantics<parallel>, #tpu.dimension_semantics<arbitrary>], iteration_bounds = array<i64: 2, 1>, scalar_prefetch = 0 : i64, scratch_operands = 0 : i64, tpu.core_type = #tpu.core_type<tc>, window_params = [{transform_indices = @transform_0, window_bounds = array<i64: 1, 18, 18, 4>}, {pipeline_mode = #tpu.pipeline_mode<synchronous>, transform_indices = @transform_1, window_bounds = array<i64: 48, 128>}, {pipeline_mode = #tpu.pipeline_mode<synchronous>, transform_indices = @transform_2, window_bounds = array<i64: 1, 128>}, {transform_indices = @transform_3, window_bounds = array<i64: 1, 256, 128>}]} {
    %c16_i32 = arith.constant 16 : i32
    %0 = arith.muli %arg1, %c16_i32 : i32
    %1 = tpu.assume_multiple %0, 16 : i32
    %c0_i32 = arith.constant 0 : i32
    %2 = arith.addi %1, %c0_i32 : i32
    %c0 = arith.constant 0 : index
    %3 = arith.index_cast %2 : i32 to index
    %c0_0 = arith.constant 0 : index
    %c0_1 = arith.constant 0 : index
    %4 = vector.load %arg2[%c0, %3, %c0_0, %c0_1] : memref<1x18x18x4xbf16, #tpu.memory_space<vmem>>, vector<1x16x18x4xbf16>
    %5 = vector.shape_cast %4 : vector<1x16x18x4xbf16> to vector<16x18x4xbf16>
    %6 = vector.extract_strided_slice %5 {offsets = [0, 0, 0], sizes = [16, 16, 4], strides = [1, 1, 1]} : vector<16x18x4xbf16> to vector<16x16x4xbf16>
    %7 = vector.extract_strided_slice %5 {offsets = [0, 1, 0], sizes = [16, 16, 4], strides = [1, 1, 1]} : vector<16x18x4xbf16> to vector<16x16x4xbf16>
    %8 = vector.extract_strided_slice %5 {offsets = [0, 2, 0], sizes = [16, 16, 4], strides = [1, 1, 1]} : vector<16x18x4xbf16> to vector<16x16x4xbf16>
    %c1_i32 = arith.constant 1 : i32
    %9 = arith.addi %1, %c1_i32 : i32
    %c0_2 = arith.constant 0 : index
    %10 = arith.index_cast %9 : i32 to index
    %c0_3 = arith.constant 0 : index
    %c0_4 = arith.constant 0 : index
    %11 = vector.load %arg2[%c0_2, %10, %c0_3, %c0_4] : memref<1x18x18x4xbf16, #tpu.memory_space<vmem>>, vector<1x16x18x4xbf16>
    %12 = vector.shape_cast %11 : vector<1x16x18x4xbf16> to vector<16x18x4xbf16>
    %13 = vector.extract_strided_slice %12 {offsets = [0, 0, 0], sizes = [16, 16, 4], strides = [1, 1, 1]} : vector<16x18x4xbf16> to vector<16x16x4xbf16>
    %14 = vector.extract_strided_slice %12 {offsets = [0, 1, 0], sizes = [16, 16, 4], strides = [1, 1, 1]} : vector<16x18x4xbf16> to vector<16x16x4xbf16>
    %15 = vector.extract_strided_slice %12 {offsets = [0, 2, 0], sizes = [16, 16, 4], strides = [1, 1, 1]} : vector<16x18x4xbf16> to vector<16x16x4xbf16>
    %c2_i32 = arith.constant 2 : i32
    %16 = arith.addi %1, %c2_i32 : i32
    %c0_5 = arith.constant 0 : index
    %17 = arith.index_cast %16 : i32 to index
    %c0_6 = arith.constant 0 : index
    %c0_7 = arith.constant 0 : index
    %18 = vector.load %arg2[%c0_5, %17, %c0_6, %c0_7] : memref<1x18x18x4xbf16, #tpu.memory_space<vmem>>, vector<1x16x18x4xbf16>
    %19 = vector.shape_cast %18 : vector<1x16x18x4xbf16> to vector<16x18x4xbf16>
    %20 = vector.extract_strided_slice %19 {offsets = [0, 0, 0], sizes = [16, 16, 4], strides = [1, 1, 1]} : vector<16x18x4xbf16> to vector<16x16x4xbf16>
    %21 = vector.extract_strided_slice %19 {offsets = [0, 1, 0], sizes = [16, 16, 4], strides = [1, 1, 1]} : vector<16x18x4xbf16> to vector<16x16x4xbf16>
    %22 = vector.extract_strided_slice %19 {offsets = [0, 2, 0], sizes = [16, 16, 4], strides = [1, 1, 1]} : vector<16x18x4xbf16> to vector<16x16x4xbf16>
    %cst = arith.constant 0.000000e+00 : bf16
    %23 = vector.broadcast %cst : bf16 to vector<16x16x12xbf16>
    %24 = tpu.concatenate %6, %7, %8, %13, %14, %15, %20, %21, %22, %23 in 2 : vector<16x16x4xbf16>, vector<16x16x4xbf16>, vector<16x16x4xbf16>, vector<16x16x4xbf16>, vector<16x16x4xbf16>, vector<16x16x4xbf16>, vector<16x16x4xbf16>, vector<16x16x4xbf16>, vector<16x16x4xbf16>, vector<16x16x12xbf16> -> vector<16x16x48xbf16>
    %25 = vector.shape_cast %24 : vector<16x16x48xbf16> to vector<256x48xbf16>
    %c0_8 = arith.constant 0 : index
    %c0_9 = arith.constant 0 : index
    %26 = vector.load %arg3[%c0_8, %c0_9] : memref<48x128xbf16, #tpu.memory_space<vmem>>, vector<48x128xbf16>
    %cst_10 = arith.constant dense<0.000000e+00> : vector<256x128xf32>
    %27 = tpu.matmul %25, %26, %cst_10 {dimension_numbers = #tpu.dot_dimension_numbers<[1], [0], [0], [1], [0, 0, 1, 1], [], []>} : vector<256x48xbf16>, vector<48x128xbf16>, vector<256x128xf32> -> vector<256x128xf32>
    %c0_11 = arith.constant 0 : index
    %c0_12 = arith.constant 0 : index
    %28 = vector.load %arg4[%c0_11, %c0_12] : memref<1x128xf32, #tpu.memory_space<vmem>>, vector<1x128xf32>
    %29 = vector.broadcast %28 : vector<1x128xf32> to vector<256x128xf32>
    %30 = arith.addf %27, %29 : vector<256x128xf32>
    %c0_13 = arith.constant 0 : index
    %c0_14 = arith.constant 0 : index
    %c0_15 = arith.constant 0 : index
    %31 = vector.load %arg5[%c0_13, %c0_14, %c0_15] : memref<1x256x128xf32, #tpu.memory_space<vmem>>, vector<1x256x128xf32>
    %32 = vector.shape_cast %31 : vector<1x256x128xf32> to vector<256x128xf32>
    %33 = vector.shape_cast %30 : vector<256x128xf32> to vector<1x256x128xf32>
    tpu.vector_store %arg5[%c0_13, %c0_14, %c0_15], %33 {strides = array<i32>} : memref<1x256x128xf32, #tpu.memory_space<vmem>>, vector<1x256x128xf32>,
    return
  }
  func.func @transform_0(%arg0: i32, %arg1: i32) -> (i32, i32, i32, i32) {
    %c0_i32 = arith.constant 0 : i32
    %c0_i32_0 = arith.constant 0 : i32
    %c0_i32_1 = arith.constant 0 : i32
    %c0_i32_2 = arith.constant 0 : i32
    return %arg0, %c0_i32, %c0_i32_0, %c0_i32_1 : i32, i32, i32, i32
  }
  func.func @transform_1(%arg0: i32, %arg1: i32) -> (i32, i32) {
    %c0_i32 = arith.constant 0 : i32
    %c0_i32_0 = arith.constant 0 : i32
    %c0_i32_1 = arith.constant 0 : i32
    return %c0_i32, %c0_i32_0 : i32, i32
  }
  func.func @transform_2(%arg0: i32, %arg1: i32) -> (i32, i32) {
    %c0_i32 = arith.constant 0 : i32
    %c0_i32_0 = arith.constant 0 : i32
    %c0_i32_1 = arith.constant 0 : i32
    return %c0_i32, %c0_i32_0 : i32, i32
  }
  func.func @transform_3(%arg0: i32, %arg1: i32) -> (i32, i32, i32) {
    %c0_i32 = arith.constant 0 : i32
    %c0_i32_0 = arith.constant 0 : i32
    return %arg0, %arg1, %c0_i32 : i32, i32, i32
  }
}

</mosaic_0001>

<llo_original>
// kernel: tpu_custom_call.1
$region0: #{tpu_custom_call.1}
  #allocation0 [shape = 'u32[]', space=smem, size = 0x4, offset = 0x4, fixed_abs, tag = 'smem constant byte address 0x4 - core index']
  #allocation1 [shape = 'u32[144,128]{1,0:T(1,128)}', space=vmem, size = 0x12000, scoped, tag = 'internal scratch']
  %s0 = inlined_call_operand.vmem [shape: bf16[2,18,18,4], index: 0, kind: input, shape index: {}]
  %s1 = inlined_call_operand.vmem [shape: bf16[48,128], index: 1, kind: input, shape index: {}]
  %s2 = inlined_call_operand.vmem [shape: f32[1,128], index: 2, kind: input, shape index: {}]
  %s3 = inlined_call_operand.hbm [shape: f32[2,256,128], index: 3, kind: output, shape index: {}]
  %s4 = sld [smem:[#allocation0]]
  $region45: #{tpu_custom_call.1} parent=0
    _
  %s6 = ssub.s32 1, %s4
  %s7 = scalar_select 0, %s6, %s4
  $region1: #{tpu_custom_call.1} parent=0
    #allocation2 [shape = 'u8[262144]{0}', space=vmem, size = 0x40000, scoped, tag = 'output window, operand 0']
    #allocation3 [shape = 's32[2]{0}', space=sflag, size = 0x8, scoped, tag = 'scoped memory for tpu_custom_call.1']
    %8 = vsyncpa [#allocation3], 0
    %s9 = scalar_lea.sflag [#allocation3], 1
    %10 = vsyncpa %s9, 0
    loop: start=0, step=1, limit=4
    $region2: #{tpu_custom_call.1} parent=1 // loop_pre_header
      _
    $region3: #{tpu_custom_call.1} parent=1 // loop_header
      %s12 = sphi 0, %s16
      %p13 = scmp.ge.s32.totalorder %s12, 4
      %s19 = sphi 0, %s31
      %s20 = sphi 0, %s27
      %s21 = sphi 0, %s19
      %s22 = sphi 0, %s20
      %s23 = sphi 0, %s21
      %s24 = sphi 0, %s22
      %s34 = sphi 0, %s36
      %s37 = sphi 0, %s34
      %s38 = sphi 0, %s37
      %s54 = sphi 0, %s38
      %s58 = sphi 0, %s58
      %s60 = sphi 0, %s58
      %s61 = sphi 0, %s60
      %s75 = sphi 0, %s61
      %s79 = sphi 0, %s79
      %s81 = sphi 0, %s79
      %s82 = sphi 0, %s81
      %s96 = sphi 0, %s82
      %s104 = sphi 0, %s106
      %s107 = sphi 0, %s104
      %s108 = sphi 0, %s107
      %s124 = sphi 0, %s108
    $region4: #{tpu_custom_call.1} parent=1 // loop_header_branch
      %15 = sbr.rel (%p13) target = $region8
    $region5: #{tpu_custom_call.1} parent=1 // loop_body
      %s17 = ssub.s32 %s12, 1
      %s18 = ssub.s32 %s12, 2
      %s25 = sadd.s32 1, %s20
      %p26 = scmp.ge.s32.totalorder %s25, 1
      %s27 = scalar_select %p26, 0, %s25
      %s28 = sadd.s32 1, %s19
      %s29 = scalar_select %p26, %s28, %s19
      %p30 = scmp.ge.s32.totalorder %s29, 2
      %s31 = scalar_select %p30, 0, %s29
      %s32 = ssub.s32 %s19, %s31
      %p33 = scmp.eq.s32.totalorder %s32, 0
      %s35 = sadd.s32 %s34, 1
      %s36 = scalar_select %p33, %s34, %s35
      %p39 = pneg %p33
      %p40 = scmp.eq.s32.totalorder %s12, 1
      %p41 = por %p39, %p40
      %p42 = scmp.ne.s32.totalorder %s34, %s37
      %p43 = scmp.eq.s32.totalorder %s12, 0
      %p44 = por %p42, %p43
      %p45 = scmp.ne.s32.totalorder %s34, %s37
      %p46 = scmp.eq.s32.totalorder %s17, 1
      %p47 = por %p45, %p46
      %p48 = scmp.ne.s32.totalorder %s37, %s38
      %p49 = scmp.eq.s32.totalorder %s17, 0
      %p50 = por %p48, %p49
      %p51 = scmp.ne.s32.totalorder %s37, %s38
      %p52 = scmp.eq.s32.totalorder %s18, 1
      %p53 = por %p51, %p52
      %p55 = scmp.ne.s32.totalorder %s38, %s54
      %p56 = scmp.eq.s32.totalorder %s18, 0
      %p57 = por %p55, %p56
      %s59 = sadd.s32 %s58, 1
      %p62 = scmp.eq.s32.totalorder %s12, 1
      %p63 = scmp.ne.s32.totalorder %s58, %s60
      %p64 = scmp.eq.s32.totalorder %s12, 0
      %p65 = por %p63, %p64
      %p66 = scmp.ne.s32.totalorder %s58, %s60
      %p67 = scmp.eq.s32.totalorder %s17, 1
      %p68 = por %p66, %p67
      %p69 = scmp.ne.s32.totalorder %s60, %s61
      %p70 = scmp.eq.s32.totalorder %s17, 0
      %p71 = por %p69, %p70
      %p72 = scmp.ne.s32.totalorder %s60, %s61
      %p73 = scmp.eq.s32.totalorder %s18, 1
      %p74 = por %p72, %p73
      %p76 = scmp.ne.s32.totalorder %s61, %s75
      %p77 = scmp.eq.s32.totalorder %s18, 0
      %p78 = por %p76, %p77
      %s80 = sadd.s32 %s79, 1
      %p83 = scmp.eq.s32.totalorder %s12, 1
      %p84 = scmp.ne.s32.totalorder %s79, %s81
      %p85 = scmp.eq.s32.totalorder %s12, 0
      %p86 = por %p84, %p85
      %p87 = scmp.ne.s32.totalorder %s79, %s81
      %p88 = scmp.eq.s32.totalorder %s17, 1
      %p89 = por %p87, %p88
      %p90 = scmp.ne.s32.totalorder %s81, %s82
      %p91 = scmp.eq.s32.totalorder %s17, 0
      %p92 = por %p90, %p91
      %p93 = scmp.ne.s32.totalorder %s81, %s82
      %p94 = scmp.eq.s32.totalorder %s18, 1
      %p95 = por %p93, %p94
      %p97 = scmp.ne.s32.totalorder %s82, %s96
      %p98 = scmp.eq.s32.totalorder %s18, 0
      %p99 = por %p97, %p98
      %s100 = ssub.s32 %s19, %s31
      %s101 = ssub.s32 %s20, %s27
      %s102 = sor.u32 %s100, %s101
      %p103 = scmp.eq.s32.totalorder %s102, 0
      %s105 = sadd.s32 %s104, 1
      %s106 = scalar_select %p103, %s104, %s105
      %p109 = pneg %p103
      %p110 = scmp.eq.s32.totalorder %s12, 1
      %p111 = por %p109, %p110
      %p112 = scmp.ne.s32.totalorder %s104, %s107
      %p113 = scmp.eq.s32.totalorder %s12, 0
      %p114 = por %p112, %p113
      %p115 = scmp.ne.s32.totalorder %s104, %s107
      %p116 = scmp.eq.s32.totalorder %s17, 1
      %p117 = por %p115, %p116
      %p118 = scmp.ne.s32.totalorder %s107, %s108
      %p119 = scmp.eq.s32.totalorder %s17, 0
      %p120 = por %p118, %p119
      %p121 = scmp.ne.s32.totalorder %s107, %s108
      %p122 = scmp.eq.s32.totalorder %s18, 1
      %p123 = por %p121, %p122
      %p125 = scmp.ne.s32.totalorder %s108, %s124
      %p126 = scmp.eq.s32.totalorder %s18, 0
      %p127 = por %p125, %p126
      %p128 = scmp.le.s32.totalorder 1, %s12
      %p129 = scmp.lt.s32.totalorder %s12, 3
      %p130 = pnand %p128, %p129
      %p131 = pneg %p130
      // Predicated region
      $region9: #{tpu_custom_call.1} parent=5 // pred_check
        _
      $region10: #{tpu_custom_call.1} parent=5 // pred_check_branch
        %133 = sbr.rel (%p130) target = $region12
      $region11: #{tpu_custom_call.1} parent=5 // pred_region
        %s134 = ssub.s32 %s12, 1
        // Predicated region
        $region13: #{tpu_custom_call.1} parent=11 // pred_check
          %p135 = pneg %p71
        $region14: #{tpu_custom_call.1} parent=11 // pred_check_branch
          %137 = sbr.rel (%p135) target = $region16
        $region15: #{tpu_custom_call.1} parent=11 // pred_region
          _
        $region16: #{tpu_custom_call.1} parent=11 // pred_fallthru
          _
        // Predicated region
        $region17: #{tpu_custom_call.1} parent=11 // pred_check
          %p138 = pneg %p92
        $region18: #{tpu_custom_call.1} parent=11 // pred_check_branch
          %140 = sbr.rel (%p138) target = $region20
        $region19: #{tpu_custom_call.1} parent=11 // pred_region
          _
        $region20: #{tpu_custom_call.1} parent=11 // pred_fallthru
          _
      $region12: #{tpu_custom_call.1} parent=5 // pred_fallthru
        _
      %p141 = scmp.lt.s32.totalorder %s12, 2
      // Predicated region
      $region21: #{tpu_custom_call.1} parent=5 // pred_check
        %p142 = pneg %p141
      $region22: #{tpu_custom_call.1} parent=5 // pred_check_branch
        %144 = sbr.rel (%p142) target = $region24
      $region23: #{tpu_custom_call.1} parent=5 // pred_region
        // Predicated region
        $region25: #{tpu_custom_call.1} parent=23 // pred_check
          %p145 = pneg %p44
        $region26: #{tpu_custom_call.1} parent=23 // pred_check_branch
          %147 = sbr.rel (%p145) target = $region28
        $region27: #{tpu_custom_call.1} parent=23 // pred_region
          %p148 = scmp.lt.s32.totalorder %s19, 1
          %s149 = scalar_select %p148, %s19, 1
          %s150 = smul.addr %s149, 54
          %s151 = smul.addr %s150, 4
          %s152 = scalar_lea.vmem %s0, %s151
        $region28: #{tpu_custom_call.1} parent=23 // pred_fallthru
          _
      $region24: #{tpu_custom_call.1} parent=5 // pred_fallthru
        _
      %p153 = scmp.le.s32.totalorder 1, %s12
      %p154 = scmp.lt.s32.totalorder %s12, 3
      %p155 = pnand %p153, %p154
      %p156 = pneg %p155
      // Predicated region
      $region29: #{tpu_custom_call.1} parent=5 // pred_check
        _
      $region30: #{tpu_custom_call.1} parent=5 // pred_check_branch
        %158 = sbr.rel (%p155) target = $region32
      $region31: #{tpu_custom_call.1} parent=5 // pred_region
        %s159 = ssub.s32 %s12, 1
        %p160 = scmp.lt.s32.totalorder %s21, 1
        %s161 = scalar_select %p160, %s21, 1
        %s162 = smul.addr %s161, 54
        %s163 = smul.addr %s162, 4
        %s164 = scalar_lea.vmem %s0, %s163
        %p165 = pneg %p50
        %p166 = pneg %p47
        %p167 = pneg %p71
        %p168 = pneg %p68
        %p169 = pneg %p92
        %p170 = pneg %p89
        %p171 = pneg %p120
        %p172 = pneg %p117
        %s173 = sand.u32 %s107, 1
        %s174 = scalar_lea.sflag [#allocation3], %s173
        %s175 = sand.u32 %s107, 1
        %s176 = smul.addr %s175, 256
        %s177 = scalar_lea.vmem [#allocation2], %s176
        %p178 = scmp.lt.s32.totalorder %s21, 1
        %s179 = scalar_select %p178, %s21, 1
        %s180 = smul.addr %s179, 54
        %s181 = smul.addr %s180, 4
        %s182 = scalar_lea.vmem %s0, %s181
        %s183 = smul.u32 32, %s22
        %s185 = smul.u32 %s22, 16
        %s186 = smul.u32 %s185, 3
        %s187 = smul.addr %s186, 4
        %s188 = scalar_lea.vmem %s182, %s187
        %v189 = vld [vmem:[%s188] sm:$0xf]
        %v190 = vld [vmem:[%s188 + $0x4] sm:$0xf]
        %v191 = vld [vmem:[%s188 + $0x8] sm:$0x1]
        %v192 = vld [vmem:[%s188 + $0xc] sm:$0xf]
        %v193 = vld [vmem:[%s188 + $0x10] sm:$0xf]
        %v194 = vld [vmem:[%s188 + $0x14] sm:$0x1]
        %v195 = vld [vmem:[%s188 + $0x18] sm:$0xf]
        %v196 = vld [vmem:[%s188 + $0x1c] sm:$0xf]
        %v197 = vld [vmem:[%s188 + $0x20] sm:$0x1]
        %v198 = vld [vmem:[%s188 + $0x24] sm:$0xf]
        %v199 = vld [vmem:[%s188 + $0x28] sm:$0xf]
        %v200 = vld [vmem:[%s188 + $0x2c] sm:$0x1]
        %v201 = vld [vmem:[%s188 + $0x30] sm:$0xf]
        %v202 = vld [vmem:[%s188 + $0x34] sm:$0xf]
        %v203 = vld [vmem:[%s188 + $0x38] sm:$0x1]
        %v204 = vld [vmem:[%s188 + $0x3c] sm:$0xf]
        %v205 = vld [vmem:[%s188 + $0x40] sm:$0xf]
        %v206 = vld [vmem:[%s188 + $0x44] sm:$0x1]
        %v207 = vld [vmem:[%s188 + $0x48] sm:$0xf]
        %v208 = vld [vmem:[%s188 + $0x4c] sm:$0xf]
        %v209 = vld [vmem:[%s188 + $0x50] sm:$0x1]
        %v210 = vld [vmem:[%s188 + $0x54] sm:$0xf]
        %v211 = vld [vmem:[%s188 + $0x58] sm:$0xf]
        %v212 = vld [vmem:[%s188 + $0x5c] sm:$0x1]
        %v213 = vld [vmem:[%s188 + $0x60] sm:$0xf]
        %v214 = vld [vmem:[%s188 + $0x64] sm:$0xf]
        %v215 = vld [vmem:[%s188 + $0x68] sm:$0x1]
        %v216 = vld [vmem:[%s188 + $0x6c] sm:$0xf]
        %v217 = vld [vmem:[%s188 + $0x70] sm:$0xf]
        %v218 = vld [vmem:[%s188 + $0x74] sm:$0x1]
        %v219 = vld [vmem:[%s188 + $0x78] sm:$0xf]
        %v220 = vld [vmem:[%s188 + $0x7c] sm:$0xf]
        %v221 = vld [vmem:[%s188 + $0x80] sm:$0x1]
        %v222 = vld [vmem:[%s188 + $0x84] sm:$0xf]
        %v223 = vld [vmem:[%s188 + $0x88] sm:$0xf]
        %v224 = vld [vmem:[%s188 + $0x8c] sm:$0x1]
        %v225 = vld [vmem:[%s188 + $0x90] sm:$0xf]
        %v226 = vld [vmem:[%s188 + $0x94] sm:$0xf]
        %v227 = vld [vmem:[%s188 + $0x98] sm:$0x1]
        %v228 = vld [vmem:[%s188 + $0x9c] sm:$0xf]
        %v229 = vld [vmem:[%s188 + $0xa0] sm:$0xf]
        %v230 = vld [vmem:[%s188 + $0xa4] sm:$0x1]
        %v231 = vld [vmem:[%s188 + $0xa8] sm:$0xf]
        %v232 = vld [vmem:[%s188 + $0xac] sm:$0xf]
        %v233 = vld [vmem:[%s188 + $0xb0] sm:$0x1]
        %v234 = vld [vmem:[%s188 + $0xb4] sm:$0xf]
        %v235 = vld [vmem:[%s188 + $0xb8] sm:$0xf]
        %v236 = vld [vmem:[%s188 + $0xbc] sm:$0x1]
        %s237 = sadd.s32 %s185, 1
        %s238 = smul.u32 %s237, 3
        %s239 = smul.addr %s238, 4
        %s240 = scalar_lea.vmem %s182, %s239
        %v241 = vld [vmem:[%s240] sm:$0xf]
        %v242 = vld [vmem:[%s240 + $0x4] sm:$0xf]
        %v243 = vld [vmem:[%s240 + $0x8] sm:$0x1]
        %v244 = vld [vmem:[%s240 + $0xc] sm:$0xf]
        %v245 = vld [vmem:[%s240 + $0x10] sm:$0xf]
        %v246 = vld [vmem:[%s240 + $0x14] sm:$0x1]
        %v247 = vld [vmem:[%s240 + $0x18] sm:$0xf]
        %v248 = vld [vmem:[%s240 + $0x1c] sm:$0xf]
        %v249 = vld [vmem:[%s240 + $0x20] sm:$0x1]
        %v250 = vld [vmem:[%s240 + $0x24] sm:$0xf]
        %v251 = vld [vmem:[%s240 + $0x28] sm:$0xf]
        %v252 = vld [vmem:[%s240 + $0x2c] sm:$0x1]
        %v253 = vld [vmem:[%s240 + $0x30] sm:$0xf]
        %v254 = vld [vmem:[%s240 + $0x34] sm:$0xf]
        %v255 = vld [vmem:[%s240 + $0x38] sm:$0x1]
        %v256 = vld [vmem:[%s240 + $0x3c] sm:$0xf]
        %v257 = vld [vmem:[%s240 + $0x40] sm:$0xf]
        %v258 = vld [vmem:[%s240 + $0x44] sm:$0x1]
        %v259 = vld [vmem:[%s240 + $0x48] sm:$0xf]
        %v260 = vld [vmem:[%s240 + $0x4c] sm:$0xf]
        %v261 = vld [vmem:[%s240 + $0x50] sm:$0x1]
        %v262 = vld [vmem:[%s240 + $0x54] sm:$0xf]
        %v263 = vld [vmem:[%s240 + $0x58] sm:$0xf]
        %v264 = vld [vmem:[%s240 + $0x5c] sm:$0x1]
        %v265 = vld [vmem:[%s240 + $0x60] sm:$0xf]
        %v266 = vld [vmem:[%s240 + $0x64] sm:$0xf]
        %v267 = vld [vmem:[%s240 + $0x68] sm:$0x1]
        %v268 = vld [vmem:[%s240 + $0x6c] sm:$0xf]
        %v269 = vld [vmem:[%s240 + $0x70] sm:$0xf]
        %v270 = vld [vmem:[%s240 + $0x74] sm:$0x1]
        %v271 = vld [vmem:[%s240 + $0x78] sm:$0xf]
        %v272 = vld [vmem:[%s240 + $0x7c] sm:$0xf]
        %v273 = vld [vmem:[%s240 + $0x80] sm:$0x1]
        %v274 = vld [vmem:[%s240 + $0x84] sm:$0xf]
        %v275 = vld [vmem:[%s240 + $0x88] sm:$0xf]
        %v276 = vld [vmem:[%s240 + $0x8c] sm:$0x1]
        %v277 = vld [vmem:[%s240 + $0x90] sm:$0xf]
        %v278 = vld [vmem:[%s240 + $0x94] sm:$0xf]
        %v279 = vld [vmem:[%s240 + $0x98] sm:$0x1]
        %v280 = vld [vmem:[%s240 + $0x9c] sm:$0xf]
        %v281 = vld [vmem:[%s240 + $0xa0] sm:$0xf]
        %v282 = vld [vmem:[%s240 + $0xa4] sm:$0x1]
        %v283 = vld [vmem:[%s240 + $0xa8] sm:$0xf]
        %v284 = vld [vmem:[%s240 + $0xac] sm:$0xf]
        %v285 = vld [vmem:[%s240 + $0xb0] sm:$0x1]
        %v286 = vld [vmem:[%s240 + $0xb4] sm:$0xf]
        %v287 = vld [vmem:[%s240 + $0xb8] sm:$0xf]
        %v288 = vld [vmem:[%s240 + $0xbc] sm:$0x1]
        %s289 = sadd.s32 %s185, 2
        %s290 = smul.u32 %s289, 3
        %s291 = smul.addr %s290, 4
        %s292 = scalar_lea.vmem %s182, %s291
        %v293 = vld [vmem:[%s292] sm:$0xf]
        %v294 = vld [vmem:[%s292 + $0x4] sm:$0xf]
        %v295 = vld [vmem:[%s292 + $0x8] sm:$0x1]
        %v296 = vld [vmem:[%s292 + $0xc] sm:$0xf]
        %v297 = vld [vmem:[%s292 + $0x10] sm:$0xf]
        %v298 = vld [vmem:[%s292 + $0x14] sm:$0x1]
        %v299 = vld [vmem:[%s292 + $0x18] sm:$0xf]
        %v300 = vld [vmem:[%s292 + $0x1c] sm:$0xf]
        %v301 = vld [vmem:[%s292 + $0x20] sm:$0x1]
        %v302 = vld [vmem:[%s292 + $0x24] sm:$0xf]
        %v303 = vld [vmem:[%s292 + $0x28] sm:$0xf]
        %v304 = vld [vmem:[%s292 + $0x2c] sm:$0x1]
        %v305 = vld [vmem:[%s292 + $0x30] sm:$0xf]
        %v306 = vld [vmem:[%s292 + $0x34] sm:$0xf]
        %v307 = vld [vmem:[%s292 + $0x38] sm:$0x1]
        %v308 = vld [vmem:[%s292 + $0x3c] sm:$0xf]
        %v309 = vld [vmem:[%s292 + $0x40] sm:$0xf]
        %v310 = vld [vmem:[%s292 + $0x44] sm:$0x1]
        %v311 = vld [vmem:[%s292 + $0x48] sm:$0xf]
        %v312 = vld [vmem:[%s292 + $0x4c] sm:$0xf]
        %v313 = vld [vmem:[%s292 + $0x50] sm:$0x1]
        %v314 = vld [vmem:[%s292 + $0x54] sm:$0xf]
        %v315 = vld [vmem:[%s292 + $0x58] sm:$0xf]
        %v316 = vld [vmem:[%s292 + $0x5c] sm:$0x1]
        %v317 = vld [vmem:[%s292 + $0x60] sm:$0xf]
        %v318 = vld [vmem:[%s292 + $0x64] sm:$0xf]
        %v319 = vld [vmem:[%s292 + $0x68] sm:$0x1]
        %v320 = vld [vmem:[%s292 + $0x6c] sm:$0xf]
        %v321 = vld [vmem:[%s292 + $0x70] sm:$0xf]
        %v322 = vld [vmem:[%s292 + $0x74] sm:$0x1]
        %v323 = vld [vmem:[%s292 + $0x78] sm:$0xf]
        %v324 = vld [vmem:[%s292 + $0x7c] sm:$0xf]
        %v325 = vld [vmem:[%s292 + $0x80] sm:$0x1]
        %v326 = vld [vmem:[%s292 + $0x84] sm:$0xf]
        %v327 = vld [vmem:[%s292 + $0x88] sm:$0xf]
        %v328 = vld [vmem:[%s292 + $0x8c] sm:$0x1]
        %v329 = vld [vmem:[%s292 + $0x90] sm:$0xf]
        %v330 = vld [vmem:[%s292 + $0x94] sm:$0xf]
        %v331 = vld [vmem:[%s292 + $0x98] sm:$0x1]
        %v332 = vld [vmem:[%s292 + $0x9c] sm:$0xf]
        %v333 = vld [vmem:[%s292 + $0xa0] sm:$0xf]
        %v334 = vld [vmem:[%s292 + $0xa4] sm:$0x1]
        %v335 = vld [vmem:[%s292 + $0xa8] sm:$0xf]
        %v336 = vld [vmem:[%s292 + $0xac] sm:$0xf]
        %v337 = vld [vmem:[%s292 + $0xb0] sm:$0x1]
        %v338 = vld [vmem:[%s292 + $0xb4] sm:$0xf]
        %v339 = vld [vmem:[%s292 + $0xb8] sm:$0xf]
        %v340 = vld [vmem:[%s292 + $0xbc] sm:$0x1]
        %v373 = vunpack.c.l.b16 %v189
        %v374 = vunpack.c.l.b16 %v190
        %v375 = vunpack.c.l.b16 %v192
        %v376 = vunpack.c.l.b16 %v193
        %v377 = vunpack.c.l.b16 %v195
        %v378 = vunpack.c.l.b16 %v196
        %v379 = vunpack.c.l.b16 %v198
        %v380 = vunpack.c.l.b16 %v199
        %v381 = vunpack.c.l.b16 %v201
        %v382 = vunpack.c.l.b16 %v202
        %v383 = vunpack.c.l.b16 %v204
        %v384 = vunpack.c.l.b16 %v205
        %v385 = vunpack.c.l.b16 %v207
        %v386 = vunpack.c.l.b16 %v208
        %v387 = vunpack.c.l.b16 %v210
        %v388 = vunpack.c.l.b16 %v211
        %v389 = vunpack.c.l.b16 %v213
        %v390 = vunpack.c.l.b16 %v214
        %v391 = vunpack.c.l.b16 %v216
        %v392 = vunpack.c.l.b16 %v217
        %v393 = vunpack.c.l.b16 %v219
        %v394 = vunpack.c.l.b16 %v220
        %v395 = vunpack.c.l.b16 %v222
        %v396 = vunpack.c.l.b16 %v223
        %v397 = vunpack.c.l.b16 %v225
        %v398 = vunpack.c.l.b16 %v226
        %v399 = vunpack.c.l.b16 %v228
        %v400 = vunpack.c.l.b16 %v229
        %v401 = vunpack.c.l.b16 %v231
        %v402 = vunpack.c.l.b16 %v232
        %v403 = vunpack.c.l.b16 %v234
        %v404 = vunpack.c.l.b16 %v235
        %v405 = vpack.c.b16 %v374, %v373
        %v406 = vpack.c.b16 %v376, %v375
        %v407 = vpack.c.b16 %v378, %v377
        %v408 = vpack.c.b16 %v380, %v379
        %v409 = vpack.c.b16 %v382, %v381
        %v410 = vpack.c.b16 %v384, %v383
        %v411 = vpack.c.b16 %v386, %v385
        %v412 = vpack.c.b16 %v388, %v387
        %v413 = vpack.c.b16 %v390, %v389
        %v414 = vpack.c.b16 %v392, %v391
        %v415 = vpack.c.b16 %v394, %v393
        %v416 = vpack.c.b16 %v396, %v395
        %v417 = vpack.c.b16 %v398, %v397
        %v418 = vpack.c.b16 %v400, %v399
        %v419 = vpack.c.b16 %v402, %v401
        %v420 = vpack.c.b16 %v404, %v403
        %v437 = vunpack.c.l.b16 %v191
        %v438 = vunpack.c.l.b16 %v194
        %v439 = vunpack.c.l.b16 %v197
        %v440 = vunpack.c.l.b16 %v200
        %v441 = vunpack.c.l.b16 %v203
        %v442 = vunpack.c.l.b16 %v206
        %v443 = vunpack.c.l.b16 %v209
        %v444 = vunpack.c.l.b16 %v212
        %v445 = vunpack.c.l.b16 %v215
        %v446 = vunpack.c.l.b16 %v218
        %v447 = vunpack.c.l.b16 %v221
        %v448 = vunpack.c.l.b16 %v224
        %v449 = vunpack.c.l.b16 %v227
        %v450 = vunpack.c.l.b16 %v230
        %v451 = vunpack.c.l.b16 %v233
        %v452 = vunpack.c.l.b16 %v236
        %v453 = vpack.c.b16 %v437, %v437
        %v454 = vpack.c.b16 %v438, %v438
        %v455 = vpack.c.b16 %v439, %v439
        %v456 = vpack.c.b16 %v440, %v440
        %v457 = vpack.c.b16 %v441, %v441
        %v458 = vpack.c.b16 %v442, %v442
        %v459 = vpack.c.b16 %v443, %v443
        %v460 = vpack.c.b16 %v444, %v444
        %v461 = vpack.c.b16 %v445, %v445
        %v462 = vpack.c.b16 %v446, %v446
        %v463 = vpack.c.b16 %v447, %v447
        %v464 = vpack.c.b16 %v448, %v448
        %v465 = vpack.c.b16 %v449, %v449
        %v466 = vpack.c.b16 %v450, %v450
        %v467 = vpack.c.b16 %v451, %v451
        %v468 = vpack.c.b16 %v452, %v452
        %vm469 = vsmask.f32 7424
        %v471 = vshrl.u32 %v405, 16
        %v473 = vshll.u32 %v405, 16
        %v475 = vrot.slane %v473, 1
        %v476 = vor.u32 %v471, %v475
        %v478 = vshll.u32 %v453, 16
        %v480 = vrot.slane %v478, 1
        %v481 = vsel %vm469, %v476, %v480
        %v483 = vshrl.u32 %v406, 16
        %v485 = vshll.u32 %v406, 16
        %v487 = vrot.slane %v485, 1
        %v488 = vor.u32 %v483, %v487
        %v490 = vshll.u32 %v454, 16
        %v492 = vrot.slane %v490, 1
        %v493 = vsel %vm469, %v488, %v492
        %v495 = vshrl.u32 %v407, 16
        %v497 = vshll.u32 %v407, 16
        %v499 = vrot.slane %v497, 1
        %v500 = vor.u32 %v495, %v499
        %v502 = vshll.u32 %v455, 16
        %v504 = vrot.slane %v502, 1
        %v505 = vsel %vm469, %v500, %v504
        %v507 = vshrl.u32 %v408, 16
        %v509 = vshll.u32 %v408, 16
        %v511 = vrot.slane %v509, 1
        %v512 = vor.u32 %v507, %v511
        %v514 = vshll.u32 %v456, 16
        %v516 = vrot.slane %v514, 1
        %v517 = vsel %vm469, %v512, %v516
        %v519 = vshrl.u32 %v409, 16
        %v521 = vshll.u32 %v409, 16
        %v523 = vrot.slane %v521, 1
        %v524 = vor.u32 %v519, %v523
        %v526 = vshll.u32 %v457, 16
        %v528 = vrot.slane %v526, 1
        %v529 = vsel %vm469, %v524, %v528
        %v531 = vshrl.u32 %v410, 16
        %v533 = vshll.u32 %v410, 16
        %v535 = vrot.slane %v533, 1
        %v536 = vor.u32 %v531, %v535
        %v538 = vshll.u32 %v458, 16
        %v540 = vrot.slane %v538, 1
        %v541 = vsel %vm469, %v536, %v540
        %v543 = vshrl.u32 %v411, 16
        %v545 = vshll.u32 %v411, 16
        %v547 = vrot.slane %v545, 1
        %v548 = vor.u32 %v543, %v547
        %v550 = vshll.u32 %v459, 16
        %v552 = vrot.slane %v550, 1
        %v553 = vsel %vm469, %v548, %v552
        %v555 = vshrl.u32 %v412, 16
        %v557 = vshll.u32 %v412, 16
        %v559 = vrot.slane %v557, 1
        %v560 = vor.u32 %v555, %v559
        %v562 = vshll.u32 %v460, 16
        %v564 = vrot.slane %v562, 1
        %v565 = vsel %vm469, %v560, %v564
        %v567 = vshrl.u32 %v413, 16
        %v569 = vshll.u32 %v413, 16
        %v571 = vrot.slane %v569, 1
        %v572 = vor.u32 %v567, %v571
        %v574 = vshll.u32 %v461, 16
        %v576 = vrot.slane %v574, 1
        %v577 = vsel %vm469, %v572, %v576
        %v579 = vshrl.u32 %v414, 16
        %v581 = vshll.u32 %v414, 16
        %v583 = vrot.slane %v581, 1
        %v584 = vor.u32 %v579, %v583
        %v586 = vshll.u32 %v462, 16
        %v588 = vrot.slane %v586, 1
        %v589 = vsel %vm469, %v584, %v588
        %v591 = vshrl.u32 %v415, 16
        %v593 = vshll.u32 %v415, 16
        %v595 = vrot.slane %v593, 1
        %v596 = vor.u32 %v591, %v595
        %v598 = vshll.u32 %v463, 16
        %v600 = vrot.slane %v598, 1
        %v601 = vsel %vm469, %v596, %v600
        %v603 = vshrl.u32 %v416, 16
        %v605 = vshll.u32 %v416, 16
        %v607 = vrot.slane %v605, 1
        %v608 = vor.u32 %v603, %v607
        %v610 = vshll.u32 %v464, 16
        %v612 = vrot.slane %v610, 1
        %v613 = vsel %vm469, %v608, %v612
        %v615 = vshrl.u32 %v417, 16
        %v617 = vshll.u32 %v417, 16
        %v619 = vrot.slane %v617, 1
        %v620 = vor.u32 %v615, %v619
        %v622 = vshll.u32 %v465, 16
        %v624 = vrot.slane %v622, 1
        %v625 = vsel %vm469, %v620, %v624
        %v627 = vshrl.u32 %v418, 16
        %v629 = vshll.u32 %v418, 16
        %v631 = vrot.slane %v629, 1
        %v632 = vor.u32 %v627, %v631
        %v634 = vshll.u32 %v466, 16
        %v636 = vrot.slane %v634, 1
        %v637 = vsel %vm469, %v632, %v636
        %v639 = vshrl.u32 %v419, 16
        %v641 = vshll.u32 %v419, 16
        %v643 = vrot.slane %v641, 1
        %v644 = vor.u32 %v639, %v643
        %v646 = vshll.u32 %v467, 16
        %v648 = vrot.slane %v646, 1
        %v649 = vsel %vm469, %v644, %v648
        %v651 = vshrl.u32 %v420, 16
        %v653 = vshll.u32 %v420, 16
        %v655 = vrot.slane %v653, 1
        %v656 = vor.u32 %v651, %v655
        %v658 = vshll.u32 %v468, 16
        %v660 = vrot.slane %v658, 1
        %v661 = vsel %vm469, %v656, %v660
        %662 = vrot.lane.b32.xlu0 %v481, 4
        %v663 = vpop.permute.xlu0 %662
        %664 = vrot.lane.b32.xlu0 %v493, 4
        %v665 = vpop.permute.xlu0 %664
        %666 = vrot.lane.b32.xlu0 %v505, 4
        %v667 = vpop.permute.xlu0 %666
        %668 = vrot.lane.b32.xlu0 %v517, 4
        %v669 = vpop.permute.xlu0 %668
        %670 = vrot.lane.b32.xlu0 %v529, 4
        %v671 = vpop.permute.xlu0 %670
        %672 = vrot.lane.b32.xlu0 %v541, 4
        %v673 = vpop.permute.xlu0 %672
        %674 = vrot.lane.b32.xlu0 %v553, 4
        %v675 = vpop.permute.xlu0 %674
        %676 = vrot.lane.b32.xlu0 %v565, 4
        %v677 = vpop.permute.xlu0 %676
        %678 = vrot.lane.b32.xlu0 %v577, 4
        %v679 = vpop.permute.xlu0 %678
        %680 = vrot.lane.b32.xlu0 %v589, 4
        %v681 = vpop.permute.xlu0 %680
        %682 = vrot.lane.b32.xlu0 %v601, 4
        %v683 = vpop.permute.xlu0 %682
        %684 = vrot.lane.b32.xlu0 %v613, 4
        %v685 = vpop.permute.xlu0 %684
        %686 = vrot.lane.b32.xlu0 %v625, 4
        %v687 = vpop.permute.xlu0 %686
        %688 = vrot.lane.b32.xlu0 %v637, 4
        %v689 = vpop.permute.xlu0 %688
        %690 = vrot.lane.b32.xlu0 %v649, 4
        %v691 = vpop.permute.xlu0 %690
        %692 = vrot.lane.b32.xlu0 %v661, 4
        %v693 = vpop.permute.xlu0 %692
        %vm694 = vcmask 1046528
        %v695 = vrot.slane %v405, 1
        %v696 = vrot.slane %v453, 1
        %v697 = vsel %vm694, %v695, %v696
        %v698 = vrot.slane %v406, 1
        %v699 = vrot.slane %v454, 1
        %v700 = vsel %vm694, %v698, %v699
        %v701 = vrot.slane %v407, 1
        %v702 = vrot.slane %v455, 1
        %v703 = vsel %vm694, %v701, %v702
        %v704 = vrot.slane %v408, 1
        %v705 = vrot.slane %v456, 1
        %v706 = vsel %vm694, %v704, %v705
        %v707 = vrot.slane %v409, 1
        %v708 = vrot.slane %v457, 1
        %v709 = vsel %vm694, %v707, %v708
        %v710 = vrot.slane %v410, 1
        %v711 = vrot.slane %v458, 1
        %v712 = vsel %vm694, %v710, %v711
        %v713 = vrot.slane %v411, 1
        %v714 = vrot.slane %v459, 1
        %v715 = vsel %vm694, %v713, %v714
        %v716 = vrot.slane %v412, 1
        %v717 = vrot.slane %v460, 1
        %v718 = vsel %vm694, %v716, %v717
        %v719 = vrot.slane %v413, 1
        %v720 = vrot.slane %v461, 1
        %v721 = vsel %vm694, %v719, %v720
        %v722 = vrot.slane %v414, 1
        %v723 = vrot.slane %v462, 1
        %v724 = vsel %vm694, %v722, %v723
        %v725 = vrot.slane %v415, 1
        %v726 = vrot.slane %v463, 1
        %v727 = vsel %vm694, %v725, %v726
        %v728 = vrot.slane %v416, 1
        %v729 = vrot.slane %v464, 1
        %v730 = vsel %vm694, %v728, %v729
        %v731 = vrot.slane %v417, 1
        %v732 = vrot.slane %v465, 1
        %v733 = vsel %vm694, %v731, %v732
        %v734 = vrot.slane %v418, 1
        %v735 = vrot.slane %v466, 1
        %v736 = vsel %vm694, %v734, %v735
        %v737 = vrot.slane %v419, 1
        %v738 = vrot.slane %v467, 1
        %v739 = vsel %vm694, %v737, %v738
        %v740 = vrot.slane %v420, 1
        %v741 = vrot.slane %v468, 1
        %v742 = vsel %vm694, %v740, %v741
        %743 = vrot.lane.b32.xlu0 %v697, 8
        %v744 = vpop.permute.xlu0 %743
        %745 = vrot.lane.b32.xlu0 %v700, 8
        %v746 = vpop.permute.xlu0 %745
        %747 = vrot.lane.b32.xlu0 %v703, 8
        %v748 = vpop.permute.xlu0 %747
        %749 = vrot.lane.b32.xlu0 %v706, 8
        %v750 = vpop.permute.xlu0 %749
        %751 = vrot.lane.b32.xlu0 %v709, 8
        %v752 = vpop.permute.xlu0 %751
        %753 = vrot.lane.b32.xlu0 %v712, 8
        %v754 = vpop.permute.xlu0 %753
        %755 = vrot.lane.b32.xlu0 %v715, 8
        %v756 = vpop.permute.xlu0 %755
        %757 = vrot.lane.b32.xlu0 %v718, 8
        %v758 = vpop.permute.xlu0 %757
        %759 = vrot.lane.b32.xlu0 %v721, 8
        %v760 = vpop.permute.xlu0 %759
        %761 = vrot.lane.b32.xlu0 %v724, 8
        %v762 = vpop.permute.xlu0 %761
        %763 = vrot.lane.b32.xlu0 %v727, 8
        %v764 = vpop.permute.xlu0 %763
        %765 = vrot.lane.b32.xlu0 %v730, 8
        %v766 = vpop.permute.xlu0 %765
        %767 = vrot.lane.b32.xlu0 %v733, 8
        %v768 = vpop.permute.xlu0 %767
        %769 = vrot.lane.b32.xlu0 %v736, 8
        %v770 = vpop.permute.xlu0 %769
        %771 = vrot.lane.b32.xlu0 %v739, 8
        %v772 = vpop.permute.xlu0 %771
        %773 = vrot.lane.b32.xlu0 %v742, 8
        %v774 = vpop.permute.xlu0 %773
        %v807 = vunpack.c.l.b16 %v241
        %v808 = vunpack.c.l.b16 %v242
        %v809 = vunpack.c.l.b16 %v244
        %v810 = vunpack.c.l.b16 %v245
        %v811 = vunpack.c.l.b16 %v247
        %v812 = vunpack.c.l.b16 %v248
        %v813 = vunpack.c.l.b16 %v250
        %v814 = vunpack.c.l.b16 %v251
        %v815 = vunpack.c.l.b16 %v253
        %v816 = vunpack.c.l.b16 %v254
        %v817 = vunpack.c.l.b16 %v256
        %v818 = vunpack.c.l.b16 %v257
        %v819 = vunpack.c.l.b16 %v259
        %v820 = vunpack.c.l.b16 %v260
        %v821 = vunpack.c.l.b16 %v262
        %v822 = vunpack.c.l.b16 %v263
        %v823 = vunpack.c.l.b16 %v265
        %v824 = vunpack.c.l.b16 %v266
        %v825 = vunpack.c.l.b16 %v268
        %v826 = vunpack.c.l.b16 %v269
        %v827 = vunpack.c.l.b16 %v271
        %v828 = vunpack.c.l.b16 %v272
        %v829 = vunpack.c.l.b16 %v274
        %v830 = vunpack.c.l.b16 %v275
        %v831 = vunpack.c.l.b16 %v277
        %v832 = vunpack.c.l.b16 %v278
        %v833 = vunpack.c.l.b16 %v280
        %v834 = vunpack.c.l.b16 %v281
        %v835 = vunpack.c.l.b16 %v283
        %v836 = vunpack.c.l.b16 %v284
        %v837 = vunpack.c.l.b16 %v286
        %v838 = vunpack.c.l.b16 %v287
        %v839 = vpack.c.b16 %v808, %v807
        %v840 = vpack.c.b16 %v810, %v809
        %v841 = vpack.c.b16 %v812, %v811
        %v842 = vpack.c.b16 %v814, %v813
        %v843 = vpack.c.b16 %v816, %v815
        %v844 = vpack.c.b16 %v818, %v817
        %v845 = vpack.c.b16 %v820, %v819
        %v846 = vpack.c.b16 %v822, %v821
        %v847 = vpack.c.b16 %v824, %v823
        %v848 = vpack.c.b16 %v826, %v825
        %v849 = vpack.c.b16 %v828, %v827
        %v850 = vpack.c.b16 %v830, %v829
        %v851 = vpack.c.b16 %v832, %v831
        %v852 = vpack.c.b16 %v834, %v833
        %v853 = vpack.c.b16 %v836, %v835
        %v854 = vpack.c.b16 %v838, %v837
        %855 = vrot.lane.b32.xlu0 %v839, 12
        %v856 = vpop.permute.xlu0 %855
        %857 = vrot.lane.b32.xlu0 %v840, 12
        %v858 = vpop.permute.xlu0 %857
        %859 = vrot.lane.b32.xlu0 %v841, 12
        %v860 = vpop.permute.xlu0 %859
        %861 = vrot.lane.b32.xlu0 %v842, 12
        %v862 = vpop.permute.xlu0 %861
        %863 = vrot.lane.b32.xlu0 %v843, 12
        %v864 = vpop.permute.xlu0 %863
        %865 = vrot.lane.b32.xlu0 %v844, 12
        %v866 = vpop.permute.xlu0 %865
        %867 = vrot.lane.b32.xlu0 %v845, 12
        %v868 = vpop.permute.xlu0 %867
        %869 = vrot.lane.b32.xlu0 %v846, 12
        %v870 = vpop.permute.xlu0 %869
        %871 = vrot.lane.b32.xlu0 %v847, 12
        %v872 = vpop.permute.xlu0 %871
        %873 = vrot.lane.b32.xlu0 %v848, 12
        %v874 = vpop.permute.xlu0 %873
        %875 = vrot.lane.b32.xlu0 %v849, 12
        %v876 = vpop.permute.xlu0 %875
        %877 = vrot.lane.b32.xlu0 %v850, 12
        %v878 = vpop.permute.xlu0 %877
        %879 = vrot.lane.b32.xlu0 %v851, 12
        %v880 = vpop.permute.xlu0 %879
        %881 = vrot.lane.b32.xlu0 %v852, 12
        %v882 = vpop.permute.xlu0 %881
        %883 = vrot.lane.b32.xlu0 %v853, 12
        %v884 = vpop.permute.xlu0 %883
        %885 = vrot.lane.b32.xlu0 %v854, 12
        %v886 = vpop.permute.xlu0 %885
        %v903 = vunpack.c.l.b16 %v243
        %v904 = vunpack.c.l.b16 %v246
        %v905 = vunpack.c.l.b16 %v249
        %v906 = vunpack.c.l.b16 %v252
        %v907 = vunpack.c.l.b16 %v255
        %v908 = vunpack.c.l.b16 %v258
        %v909 = vunpack.c.l.b16 %v261
        %v910 = vunpack.c.l.b16 %v264
        %v911 = vunpack.c.l.b16 %v267
        %v912 = vunpack.c.l.b16 %v270
        %v913 = vunpack.c.l.b16 %v273
        %v914 = vunpack.c.l.b16 %v276
        %v915 = vunpack.c.l.b16 %v279
        %v916 = vunpack.c.l.b16 %v282
        %v917 = vunpack.c.l.b16 %v285
        %v918 = vunpack.c.l.b16 %v288
        %v919 = vpack.c.b16 %v903, %v903
        %v920 = vpack.c.b16 %v904, %v904
        %v921 = vpack.c.b16 %v905, %v905
        %v922 = vpack.c.b16 %v906, %v906
        %v923 = vpack.c.b16 %v907, %v907
        %v924 = vpack.c.b16 %v908, %v908
        %v925 = vpack.c.b16 %v909, %v909
        %v926 = vpack.c.b16 %v910, %v910
        %v927 = vpack.c.b16 %v911, %v911
        %v928 = vpack.c.b16 %v912, %v912
        %v929 = vpack.c.b16 %v913, %v913
        %v930 = vpack.c.b16 %v914, %v914
        %v931 = vpack.c.b16 %v915, %v915
        %v932 = vpack.c.b16 %v916, %v916
        %v933 = vpack.c.b16 %v917, %v917
        %v934 = vpack.c.b16 %v918, %v918
        %v936 = vshrl.u32 %v839, 16
        %v938 = vshll.u32 %v839, 16
        %v940 = vrot.slane %v938, 1
        %v941 = vor.u32 %v936, %v940
        %v943 = vshll.u32 %v919, 16
        %v945 = vrot.slane %v943, 1
        %v946 = vsel %vm469, %v941, %v945
        %v948 = vshrl.u32 %v840, 16
        %v950 = vshll.u32 %v840, 16
        %v952 = vrot.slane %v950, 1
        %v953 = vor.u32 %v948, %v952
        %v955 = vshll.u32 %v920, 16
        %v957 = vrot.slane %v955, 1
        %v958 = vsel %vm469, %v953, %v957
        %v960 = vshrl.u32 %v841, 16
        %v962 = vshll.u32 %v841, 16
        %v964 = vrot.slane %v962, 1
        %v965 = vor.u32 %v960, %v964
        %v967 = vshll.u32 %v921, 16
        %v969 = vrot.slane %v967, 1
        %v970 = vsel %vm469, %v965, %v969
        %v972 = vshrl.u32 %v842, 16
        %v974 = vshll.u32 %v842, 16
        %v976 = vrot.slane %v974, 1
        %v977 = vor.u32 %v972, %v976
        %v979 = vshll.u32 %v922, 16
        %v981 = vrot.slane %v979, 1
        %v982 = vsel %vm469, %v977, %v981
        %v984 = vshrl.u32 %v843, 16
        %v986 = vshll.u32 %v843, 16
        %v988 = vrot.slane %v986, 1
        %v989 = vor.u32 %v984, %v988
        %v991 = vshll.u32 %v923, 16
        %v993 = vrot.slane %v991, 1
        %v994 = vsel %vm469, %v989, %v993
        %v996 = vshrl.u32 %v844, 16
        %v998 = vshll.u32 %v844, 16
        %v1000 = vrot.slane %v998, 1
        %v1001 = vor.u32 %v996, %v1000
        %v1003 = vshll.u32 %v924, 16
        %v1005 = vrot.slane %v1003, 1
        %v1006 = vsel %vm469, %v1001, %v1005
        %v1008 = vshrl.u32 %v845, 16
        %v1010 = vshll.u32 %v845, 16
        %v1012 = vrot.slane %v1010, 1
        %v1013 = vor.u32 %v1008, %v1012
        %v1015 = vshll.u32 %v925, 16
        %v1017 = vrot.slane %v1015, 1
        %v1018 = vsel %vm469, %v1013, %v1017
        %v1020 = vshrl.u32 %v846, 16
        %v1022 = vshll.u32 %v846, 16
        %v1024 = vrot.slane %v1022, 1
        %v1025 = vor.u32 %v1020, %v1024
        %v1027 = vshll.u32 %v926, 16
        %v1029 = vrot.slane %v1027, 1
        %v1030 = vsel %vm469, %v1025, %v1029
        %v1032 = vshrl.u32 %v847, 16
        %v1034 = vshll.u32 %v847, 16
        %v1036 = vrot.slane %v1034, 1
        %v1037 = vor.u32 %v1032, %v1036
        %v1039 = vshll.u32 %v927, 16
        %v1041 = vrot.slane %v1039, 1
        %v1042 = vsel %vm469, %v1037, %v1041
        %v1044 = vshrl.u32 %v848, 16
        %v1046 = vshll.u32 %v848, 16
        %v1048 = vrot.slane %v1046, 1
        %v1049 = vor.u32 %v1044, %v1048
        %v1051 = vshll.u32 %v928, 16
        %v1053 = vrot.slane %v1051, 1
        %v1054 = vsel %vm469, %v1049, %v1053
        %v1056 = vshrl.u32 %v849, 16
        %v1058 = vshll.u32 %v849, 16
        %v1060 = vrot.slane %v1058, 1
        %v1061 = vor.u32 %v1056, %v1060
        %v1063 = vshll.u32 %v929, 16
        %v1065 = vrot.slane %v1063, 1
        %v1066 = vsel %vm469, %v1061, %v1065
        %v1068 = vshrl.u32 %v850, 16
        %v1070 = vshll.u32 %v850, 16
        %v1072 = vrot.slane %v1070, 1
        %v1073 = vor.u32 %v1068, %v1072
        %v1075 = vshll.u32 %v930, 16
        %v1077 = vrot.slane %v1075, 1
        %v1078 = vsel %vm469, %v1073, %v1077
        %v1080 = vshrl.u32 %v851, 16
        %v1082 = vshll.u32 %v851, 16
        %v1084 = vrot.slane %v1082, 1
        %v1085 = vor.u32 %v1080, %v1084
        %v1087 = vshll.u32 %v931, 16
        %v1089 = vrot.slane %v1087, 1
        %v1090 = vsel %vm469, %v1085, %v1089
        %v1092 = vshrl.u32 %v852, 16
        %v1094 = vshll.u32 %v852, 16
        %v1096 = vrot.slane %v1094, 1
        %v1097 = vor.u32 %v1092, %v1096
        %v1099 = vshll.u32 %v932, 16
        %v1101 = vrot.slane %v1099, 1
        %v1102 = vsel %vm469, %v1097, %v1101
        %v1104 = vshrl.u32 %v853, 16
        %v1106 = vshll.u32 %v853, 16
        %v1108 = vrot.slane %v1106, 1
        %v1109 = vor.u32 %v1104, %v1108
        %v1111 = vshll.u32 %v933, 16
        %v1113 = vrot.slane %v1111, 1
        %v1114 = vsel %vm469, %v1109, %v1113
        %v1116 = vshrl.u32 %v854, 16
        %v1118 = vshll.u32 %v854, 16
        %v1120 = vrot.slane %v1118, 1
        %v1121 = vor.u32 %v1116, %v1120
        %v1123 = vshll.u32 %v934, 16
        %v1125 = vrot.slane %v1123, 1
        %v1126 = vsel %vm469, %v1121, %v1125
        %1127 = vrot.lane.b32.xlu0 %v946, 16
        %v1128 = vpop.permute.xlu0 %1127
        %1129 = vrot.lane.b32.xlu0 %v958, 16
        %v1130 = vpop.permute.xlu0 %1129
        %1131 = vrot.lane.b32.xlu0 %v970, 16
        %v1132 = vpop.permute.xlu0 %1131
        %1133 = vrot.lane.b32.xlu0 %v982, 16
        %v1134 = vpop.permute.xlu0 %1133
        %1135 = vrot.lane.b32.xlu0 %v994, 16
        %v1136 = vpop.permute.xlu0 %1135
        %1137 = vrot.lane.b32.xlu0 %v1006, 16
        %v1138 = vpop.permute.xlu0 %1137
        %1139 = vrot.lane.b32.xlu0 %v1018, 16
        %v1140 = vpop.permute.xlu0 %1139
        %1141 = vrot.lane.b32.xlu0 %v1030, 16
        %v1142 = vpop.permute.xlu0 %1141
        %1143 = vrot.lane.b32.xlu0 %v1042, 16
        %v1144 = vpop.permute.xlu0 %1143
        %1145 = vrot.lane.b32.xlu0 %v1054, 16
        %v1146 = vpop.permute.xlu0 %1145
        %1147 = vrot.lane.b32.xlu0 %v1066, 16
        %v1148 = vpop.permute.xlu0 %1147
        %1149 = vrot.lane.b32.xlu0 %v1078, 16
        %v1150 = vpop.permute.xlu0 %1149
        %1151 = vrot.lane.b32.xlu0 %v1090, 16
        %v1152 = vpop.permute.xlu0 %1151
        %1153 = vrot.lane.b32.xlu0 %v1102, 16
        %v1154 = vpop.permute.xlu0 %1153
        %1155 = vrot.lane.b32.xlu0 %v1114, 16
        %v1156 = vpop.permute.xlu0 %1155
        %1157 = vrot.lane.b32.xlu0 %v1126, 16
        %v1158 = vpop.permute.xlu0 %1157
        %v1159 = vrot.slane %v839, 1
        %v1160 = vrot.slane %v919, 1
        %v1161 = vsel %vm694, %v1159, %v1160
        %v1162 = vrot.slane %v840, 1
        %v1163 = vrot.slane %v920, 1
        %v1164 = vsel %vm694, %v1162, %v1163
        %v1165 = vrot.slane %v841, 1
        %v1166 = vrot.slane %v921, 1
        %v1167 = vsel %vm694, %v1165, %v1166
        %v1168 = vrot.slane %v842, 1
        %v1169 = vrot.slane %v922, 1
        %v1170 = vsel %vm694, %v1168, %v1169
        %v1171 = vrot.slane %v843, 1
        %v1172 = vrot.slane %v923, 1
        %v1173 = vsel %vm694, %v1171, %v1172
        %v1174 = vrot.slane %v844, 1
        %v1175 = vrot.slane %v924, 1
        %v1176 = vsel %vm694, %v1174, %v1175
        %v1177 = vrot.slane %v845, 1
        %v1178 = vrot.slane %v925, 1
        %v1179 = vsel %vm694, %v1177, %v1178
        %v1180 = vrot.slane %v846, 1
        %v1181 = vrot.slane %v926, 1
        %v1182 = vsel %vm694, %v1180, %v1181
        %v1183 = vrot.slane %v847, 1
        %v1184 = vrot.slane %v927, 1
        %v1185 = vsel %vm694, %v1183, %v1184
        %v1186 = vrot.slane %v848, 1
        %v1187 = vrot.slane %v928, 1
        %v1188 = vsel %vm694, %v1186, %v1187
        %v1189 = vrot.slane %v849, 1
        %v1190 = vrot.slane %v929, 1
        %v1191 = vsel %vm694, %v1189, %v1190
        %v1192 = vrot.slane %v850, 1
        %v1193 = vrot.slane %v930, 1
        %v1194 = vsel %vm694, %v1192, %v1193
        %v1195 = vrot.slane %v851, 1
        %v1196 = vrot.slane %v931, 1
        %v1197 = vsel %vm694, %v1195, %v1196
        %v1198 = vrot.slane %v852, 1
        %v1199 = vrot.slane %v932, 1
        %v1200 = vsel %vm694, %v1198, %v1199
        %v1201 = vrot.slane %v853, 1
        %v1202 = vrot.slane %v933, 1
        %v1203 = vsel %vm694, %v1201, %v1202
        %v1204 = vrot.slane %v854, 1
        %v1205 = vrot.slane %v934, 1
        %v1206 = vsel %vm694, %v1204, %v1205
        %1207 = vrot.lane.b32.xlu0 %v1161, 20
        %v1208 = vpop.permute.xlu0 %1207
        %1209 = vrot.lane.b32.xlu0 %v1164, 20
        %v1210 = vpop.permute.xlu0 %1209
        %1211 = vrot.lane.b32.xlu0 %v1167, 20
        %v1212 = vpop.permute.xlu0 %1211
        %1213 = vrot.lane.b32.xlu0 %v1170, 20
        %v1214 = vpop.permute.xlu0 %1213
        %1215 = vrot.lane.b32.xlu0 %v1173, 20
        %v1216 = vpop.permute.xlu0 %1215
        %1217 = vrot.lane.b32.xlu0 %v1176, 20
        %v1218 = vpop.permute.xlu0 %1217
        %1219 = vrot.lane.b32.xlu0 %v1179, 20
        %v1220 = vpop.permute.xlu0 %1219
        %1221 = vrot.lane.b32.xlu0 %v1182, 20
        %v1222 = vpop.permute.xlu0 %1221
        %1223 = vrot.lane.b32.xlu0 %v1185, 20
        %v1224 = vpop.permute.xlu0 %1223
        %1225 = vrot.lane.b32.xlu0 %v1188, 20
        %v1226 = vpop.permute.xlu0 %1225
        %1227 = vrot.lane.b32.xlu0 %v1191, 20
        %v1228 = vpop.permute.xlu0 %1227
        %1229 = vrot.lane.b32.xlu0 %v1194, 20
        %v1230 = vpop.permute.xlu0 %1229
        %1231 = vrot.lane.b32.xlu0 %v1197, 20
        %v1232 = vpop.permute.xlu0 %1231
        %1233 = vrot.lane.b32.xlu0 %v1200, 20
        %v1234 = vpop.permute.xlu0 %1233
        %1235 = vrot.lane.b32.xlu0 %v1203, 20
        %v1236 = vpop.permute.xlu0 %1235
        %1237 = vrot.lane.b32.xlu0 %v1206, 20
        %v1238 = vpop.permute.xlu0 %1237
        %v1271 = vunpack.c.l.b16 %v293
        %v1272 = vunpack.c.l.b16 %v294
        %v1273 = vunpack.c.l.b16 %v296
        %v1274 = vunpack.c.l.b16 %v297
        %v1275 = vunpack.c.l.b16 %v299
        %v1276 = vunpack.c.l.b16 %v300
        %v1277 = vunpack.c.l.b16 %v302
        %v1278 = vunpack.c.l.b16 %v303
        %v1279 = vunpack.c.l.b16 %v305
        %v1280 = vunpack.c.l.b16 %v306
        %v1281 = vunpack.c.l.b16 %v308
        %v1282 = vunpack.c.l.b16 %v309
        %v1283 = vunpack.c.l.b16 %v311
        %v1284 = vunpack.c.l.b16 %v312
        %v1285 = vunpack.c.l.b16 %v314
        %v1286 = vunpack.c.l.b16 %v315
        %v1287 = vunpack.c.l.b16 %v317
        %v1288 = vunpack.c.l.b16 %v318
        %v1289 = vunpack.c.l.b16 %v320
        %v1290 = vunpack.c.l.b16 %v321
        %v1291 = vunpack.c.l.b16 %v323
        %v1292 = vunpack.c.l.b16 %v324
        %v1293 = vunpack.c.l.b16 %v326
        %v1294 = vunpack.c.l.b16 %v327
        %v1295 = vunpack.c.l.b16 %v329
        %v1296 = vunpack.c.l.b16 %v330
        %v1297 = vunpack.c.l.b16 %v332
        %v1298 = vunpack.c.l.b16 %v333
        %v1299 = vunpack.c.l.b16 %v335
        %v1300 = vunpack.c.l.b16 %v336
        %v1301 = vunpack.c.l.b16 %v338
        %v1302 = vunpack.c.l.b16 %v339
        %v1303 = vpack.c.b16 %v1272, %v1271
        %v1304 = vpack.c.b16 %v1274, %v1273
        %v1305 = vpack.c.b16 %v1276, %v1275
        %v1306 = vpack.c.b16 %v1278, %v1277
        %v1307 = vpack.c.b16 %v1280, %v1279
        %v1308 = vpack.c.b16 %v1282, %v1281
        %v1309 = vpack.c.b16 %v1284, %v1283
        %v1310 = vpack.c.b16 %v1286, %v1285
        %v1311 = vpack.c.b16 %v1288, %v1287
        %v1312 = vpack.c.b16 %v1290, %v1289
        %v1313 = vpack.c.b16 %v1292, %v1291
        %v1314 = vpack.c.b16 %v1294, %v1293
        %v1315 = vpack.c.b16 %v1296, %v1295
        %v1316 = vpack.c.b16 %v1298, %v1297
        %v1317 = vpack.c.b16 %v1300, %v1299
        %v1318 = vpack.c.b16 %v1302, %v1301
        %1319 = vrot.lane.b32.xlu0 %v1303, 24
        %v1320 = vpop.permute.xlu0 %1319
        %1321 = vrot.lane.b32.xlu0 %v1304, 24
        %v1322 = vpop.permute.xlu0 %1321
        %1323 = vrot.lane.b32.xlu0 %v1305, 24
        %v1324 = vpop.permute.xlu0 %1323
        %1325 = vrot.lane.b32.xlu0 %v1306, 24
        %v1326 = vpop.permute.xlu0 %1325
        %1327 = vrot.lane.b32.xlu0 %v1307, 24
        %v1328 = vpop.permute.xlu0 %1327
        %1329 = vrot.lane.b32.xlu0 %v1308, 24
        %v1330 = vpop.permute.xlu0 %1329
        %1331 = vrot.lane.b32.xlu0 %v1309, 24
        %v1332 = vpop.permute.xlu0 %1331
        %1333 = vrot.lane.b32.xlu0 %v1310, 24
        %v1334 = vpop.permute.xlu0 %1333
        %1335 = vrot.lane.b32.xlu0 %v1311, 24
        %v1336 = vpop.permute.xlu0 %1335
        %1337 = vrot.lane.b32.xlu0 %v1312, 24
        %v1338 = vpop.permute.xlu0 %1337
        %1339 = vrot.lane.b32.xlu0 %v1313, 24
        %v1340 = vpop.permute.xlu0 %1339
        %1341 = vrot.lane.b32.xlu0 %v1314, 24
        %v1342 = vpop.permute.xlu0 %1341
        %1343 = vrot.lane.b32.xlu0 %v1315, 24
        %v1344 = vpop.permute.xlu0 %1343
        %1345 = vrot.lane.b32.xlu0 %v1316, 24
        %v1346 = vpop.permute.xlu0 %1345
        %1347 = vrot.lane.b32.xlu0 %v1317, 24
        %v1348 = vpop.permute.xlu0 %1347
        %1349 = vrot.lane.b32.xlu0 %v1318, 24
        %v1350 = vpop.permute.xlu0 %1349
        %v1367 = vunpack.c.l.b16 %v295
        %v1368 = vunpack.c.l.b16 %v298
        %v1369 = vunpack.c.l.b16 %v301
        %v1370 = vunpack.c.l.b16 %v304
        %v1371 = vunpack.c.l.b16 %v307
        %v1372 = vunpack.c.l.b16 %v310
        %v1373 = vunpack.c.l.b16 %v313
        %v1374 = vunpack.c.l.b16 %v316
        %v1375 = vunpack.c.l.b16 %v319
        %v1376 = vunpack.c.l.b16 %v322
        %v1377 = vunpack.c.l.b16 %v325
        %v1378 = vunpack.c.l.b16 %v328
        %v1379 = vunpack.c.l.b16 %v331
        %v1380 = vunpack.c.l.b16 %v334
        %v1381 = vunpack.c.l.b16 %v337
        %v1382 = vunpack.c.l.b16 %v340
        %v1383 = vpack.c.b16 %v1367, %v1367
        %v1384 = vpack.c.b16 %v1368, %v1368
        %v1385 = vpack.c.b16 %v1369, %v1369
        %v1386 = vpack.c.b16 %v1370, %v1370
        %v1387 = vpack.c.b16 %v1371, %v1371
        %v1388 = vpack.c.b16 %v1372, %v1372
        %v1389 = vpack.c.b16 %v1373, %v1373
        %v1390 = vpack.c.b16 %v1374, %v1374
        %v1391 = vpack.c.b16 %v1375, %v1375
        %v1392 = vpack.c.b16 %v1376, %v1376
        %v1393 = vpack.c.b16 %v1377, %v1377
        %v1394 = vpack.c.b16 %v1378, %v1378
        %v1395 = vpack.c.b16 %v1379, %v1379
        %v1396 = vpack.c.b16 %v1380, %v1380
        %v1397 = vpack.c.b16 %v1381, %v1381
        %v1398 = vpack.c.b16 %v1382, %v1382
        %v1400 = vshrl.u32 %v1303, 16
        %v1402 = vshll.u32 %v1303, 16
        %v1404 = vrot.slane %v1402, 1
        %v1405 = vor.u32 %v1400, %v1404
        %v1407 = vshll.u32 %v1383, 16
        %v1409 = vrot.slane %v1407, 1
        %v1410 = vsel %vm469, %v1405, %v1409
        %v1412 = vshrl.u32 %v1304, 16
        %v1414 = vshll.u32 %v1304, 16
        %v1416 = vrot.slane %v1414, 1
        %v1417 = vor.u32 %v1412, %v1416
        %v1419 = vshll.u32 %v1384, 16
        %v1421 = vrot.slane %v1419, 1
        %v1422 = vsel %vm469, %v1417, %v1421
        %v1424 = vshrl.u32 %v1305, 16
        %v1426 = vshll.u32 %v1305, 16
        %v1428 = vrot.slane %v1426, 1
        %v1429 = vor.u32 %v1424, %v1428
        %v1431 = vshll.u32 %v1385, 16
        %v1433 = vrot.slane %v1431, 1
        %v1434 = vsel %vm469, %v1429, %v1433
        %v1436 = vshrl.u32 %v1306, 16
        %v1438 = vshll.u32 %v1306, 16
        %v1440 = vrot.slane %v1438, 1
        %v1441 = vor.u32 %v1436, %v1440
        %v1443 = vshll.u32 %v1386, 16
        %v1445 = vrot.slane %v1443, 1
        %v1446 = vsel %vm469, %v1441, %v1445
        %v1448 = vshrl.u32 %v1307, 16
        %v1450 = vshll.u32 %v1307, 16
        %v1452 = vrot.slane %v1450, 1
        %v1453 = vor.u32 %v1448, %v1452
        %v1455 = vshll.u32 %v1387, 16
        %v1457 = vrot.slane %v1455, 1
        %v1458 = vsel %vm469, %v1453, %v1457
        %v1460 = vshrl.u32 %v1308, 16
        %v1462 = vshll.u32 %v1308, 16
        %v1464 = vrot.slane %v1462, 1
        %v1465 = vor.u32 %v1460, %v1464
        %v1467 = vshll.u32 %v1388, 16
        %v1469 = vrot.slane %v1467, 1
        %v1470 = vsel %vm469, %v1465, %v1469
        %v1472 = vshrl.u32 %v1309, 16
        %v1474 = vshll.u32 %v1309, 16
        %v1476 = vrot.slane %v1474, 1
        %v1477 = vor.u32 %v1472, %v1476
        %v1479 = vshll.u32 %v1389, 16
        %v1481 = vrot.slane %v1479, 1
        %v1482 = vsel %vm469, %v1477, %v1481
        %v1484 = vshrl.u32 %v1310, 16
        %v1486 = vshll.u32 %v1310, 16
        %v1488 = vrot.slane %v1486, 1
        %v1489 = vor.u32 %v1484, %v1488
        %v1491 = vshll.u32 %v1390, 16
        %v1493 = vrot.slane %v1491, 1
        %v1494 = vsel %vm469, %v1489, %v1493
        %v1496 = vshrl.u32 %v1311, 16
        %v1498 = vshll.u32 %v1311, 16
        %v1500 = vrot.slane %v1498, 1
        %v1501 = vor.u32 %v1496, %v1500
        %v1503 = vshll.u32 %v1391, 16
        %v1505 = vrot.slane %v1503, 1
        %v1506 = vsel %vm469, %v1501, %v1505
        %v1508 = vshrl.u32 %v1312, 16
        %v1510 = vshll.u32 %v1312, 16
        %v1512 = vrot.slane %v1510, 1
        %v1513 = vor.u32 %v1508, %v1512
        %v1515 = vshll.u32 %v1392, 16
        %v1517 = vrot.slane %v1515, 1
        %v1518 = vsel %vm469, %v1513, %v1517
        %v1520 = vshrl.u32 %v1313, 16
        %v1522 = vshll.u32 %v1313, 16
        %v1524 = vrot.slane %v1522, 1
        %v1525 = vor.u32 %v1520, %v1524
        %v1527 = vshll.u32 %v1393, 16
        %v1529 = vrot.slane %v1527, 1
        %v1530 = vsel %vm469, %v1525, %v1529
        %v1532 = vshrl.u32 %v1314, 16
        %v1534 = vshll.u32 %v1314, 16
        %v1536 = vrot.slane %v1534, 1
        %v1537 = vor.u32 %v1532, %v1536
        %v1539 = vshll.u32 %v1394, 16
        %v1541 = vrot.slane %v1539, 1
        %v1542 = vsel %vm469, %v1537, %v1541
        %v1544 = vshrl.u32 %v1315, 16
        %v1546 = vshll.u32 %v1315, 16
        %v1548 = vrot.slane %v1546, 1
        %v1549 = vor.u32 %v1544, %v1548
        %v1551 = vshll.u32 %v1395, 16
        %v1553 = vrot.slane %v1551, 1
        %v1554 = vsel %vm469, %v1549, %v1553
        %v1556 = vshrl.u32 %v1316, 16
        %v1558 = vshll.u32 %v1316, 16
        %v1560 = vrot.slane %v1558, 1
        %v1561 = vor.u32 %v1556, %v1560
        %v1563 = vshll.u32 %v1396, 16
        %v1565 = vrot.slane %v1563, 1
        %v1566 = vsel %vm469, %v1561, %v1565
        %v1568 = vshrl.u32 %v1317, 16
        %v1570 = vshll.u32 %v1317, 16
        %v1572 = vrot.slane %v1570, 1
        %v1573 = vor.u32 %v1568, %v1572
        %v1575 = vshll.u32 %v1397, 16
        %v1577 = vrot.slane %v1575, 1
        %v1578 = vsel %vm469, %v1573, %v1577
        %v1580 = vshrl.u32 %v1318, 16
        %v1582 = vshll.u32 %v1318, 16
        %v1584 = vrot.slane %v1582, 1
        %v1585 = vor.u32 %v1580, %v1584
        %v1587 = vshll.u32 %v1398, 16
        %v1589 = vrot.slane %v1587, 1
        %v1590 = vsel %vm469, %v1585, %v1589
        %1591 = vrot.lane.b32.xlu0 %v1410, 28
        %v1592 = vpop.permute.xlu0 %1591
        %1593 = vrot.lane.b32.xlu0 %v1422, 28
        %v1594 = vpop.permute.xlu0 %1593
        %1595 = vrot.lane.b32.xlu0 %v1434, 28
        %v1596 = vpop.permute.xlu0 %1595
        %1597 = vrot.lane.b32.xlu0 %v1446, 28
        %v1598 = vpop.permute.xlu0 %1597
        %1599 = vrot.lane.b32.xlu0 %v1458, 28
        %v1600 = vpop.permute.xlu0 %1599
        %1601 = vrot.lane.b32.xlu0 %v1470, 28
        %v1602 = vpop.permute.xlu0 %1601
        %1603 = vrot.lane.b32.xlu0 %v1482, 28
        %v1604 = vpop.permute.xlu0 %1603
        %1605 = vrot.lane.b32.xlu0 %v1494, 28
        %v1606 = vpop.permute.xlu0 %1605
        %1607 = vrot.lane.b32.xlu0 %v1506, 28
        %v1608 = vpop.permute.xlu0 %1607
        %1609 = vrot.lane.b32.xlu0 %v1518, 28
        %v1610 = vpop.permute.xlu0 %1609
        %1611 = vrot.lane.b32.xlu0 %v1530, 28
        %v1612 = vpop.permute.xlu0 %1611
        %1613 = vrot.lane.b32.xlu0 %v1542, 28
        %v1614 = vpop.permute.xlu0 %1613
        %1615 = vrot.lane.b32.xlu0 %v1554, 28
        %v1616 = vpop.permute.xlu0 %1615
        %1617 = vrot.lane.b32.xlu0 %v1566, 28
        %v1618 = vpop.permute.xlu0 %1617
        %1619 = vrot.lane.b32.xlu0 %v1578, 28
        %v1620 = vpop.permute.xlu0 %1619
        %1621 = vrot.lane.b32.xlu0 %v1590, 28
        %v1622 = vpop.permute.xlu0 %1621
        %v1623 = vrot.slane %v1303, 1
        %v1624 = vrot.slane %v1383, 1
        %v1625 = vsel %vm694, %v1623, %v1624
        %v1626 = vrot.slane %v1304, 1
        %v1627 = vrot.slane %v1384, 1
        %v1628 = vsel %vm694, %v1626, %v1627
        %v1629 = vrot.slane %v1305, 1
        %v1630 = vrot.slane %v1385, 1
        %v1631 = vsel %vm694, %v1629, %v1630
        %v1632 = vrot.slane %v1306, 1
        %v1633 = vrot.slane %v1386, 1
        %v1634 = vsel %vm694, %v1632, %v1633
        %v1635 = vrot.slane %v1307, 1
        %v1636 = vrot.slane %v1387, 1
        %v1637 = vsel %vm694, %v1635, %v1636
        %v1638 = vrot.slane %v1308, 1
        %v1639 = vrot.slane %v1388, 1
        %v1640 = vsel %vm694, %v1638, %v1639
        %v1641 = vrot.slane %v1309, 1
        %v1642 = vrot.slane %v1389, 1
        %v1643 = vsel %vm694, %v1641, %v1642
        %v1644 = vrot.slane %v1310, 1
        %v1645 = vrot.slane %v1390, 1
        %v1646 = vsel %vm694, %v1644, %v1645
        %v1647 = vrot.slane %v1311, 1
        %v1648 = vrot.slane %v1391, 1
        %v1649 = vsel %vm694, %v1647, %v1648
        %v1650 = vrot.slane %v1312, 1
        %v1651 = vrot.slane %v1392, 1
        %v1652 = vsel %vm694, %v1650, %v1651
        %v1653 = vrot.slane %v1313, 1
        %v1654 = vrot.slane %v1393, 1
        %v1655 = vsel %vm694, %v1653, %v1654
        %v1656 = vrot.slane %v1314, 1
        %v1657 = vrot.slane %v1394, 1
        %v1658 = vsel %vm694, %v1656, %v1657
        %v1659 = vrot.slane %v1315, 1
        %v1660 = vrot.slane %v1395, 1
        %v1661 = vsel %vm694, %v1659, %v1660
        %v1662 = vrot.slane %v1316, 1
        %v1663 = vrot.slane %v1396, 1
        %v1664 = vsel %vm694, %v1662, %v1663
        %v1665 = vrot.slane %v1317, 1
        %v1666 = vrot.slane %v1397, 1
        %v1667 = vsel %vm694, %v1665, %v1666
        %v1668 = vrot.slane %v1318, 1
        %v1669 = vrot.slane %v1398, 1
        %v1670 = vsel %vm694, %v1668, %v1669
        %1671 = vrot.lane.b32.xlu0 %v1625, 32
        %v1672 = vpop.permute.xlu0 %1671
        %1673 = vrot.lane.b32.xlu0 %v1628, 32
        %v1674 = vpop.permute.xlu0 %1673
        %1675 = vrot.lane.b32.xlu0 %v1631, 32
        %v1676 = vpop.permute.xlu0 %1675
        %1677 = vrot.lane.b32.xlu0 %v1634, 32
        %v1678 = vpop.permute.xlu0 %1677
        %1679 = vrot.lane.b32.xlu0 %v1637, 32
        %v1680 = vpop.permute.xlu0 %1679
        %1681 = vrot.lane.b32.xlu0 %v1640, 32
        %v1682 = vpop.permute.xlu0 %1681
        %1683 = vrot.lane.b32.xlu0 %v1643, 32
        %v1684 = vpop.permute.xlu0 %1683
        %1685 = vrot.lane.b32.xlu0 %v1646, 32
        %v1686 = vpop.permute.xlu0 %1685
        %1687 = vrot.lane.b32.xlu0 %v1649, 32
        %v1688 = vpop.permute.xlu0 %1687
        %1689 = vrot.lane.b32.xlu0 %v1652, 32
        %v1690 = vpop.permute.xlu0 %1689
        %1691 = vrot.lane.b32.xlu0 %v1655, 32
        %v1692 = vpop.permute.xlu0 %1691
        %1693 = vrot.lane.b32.xlu0 %v1658, 32
        %v1694 = vpop.permute.xlu0 %1693
        %1695 = vrot.lane.b32.xlu0 %v1661, 32
        %v1696 = vpop.permute.xlu0 %1695
        %1697 = vrot.lane.b32.xlu0 %v1664, 32
        %v1698 = vpop.permute.xlu0 %1697
        %1699 = vrot.lane.b32.xlu0 %v1667, 32
        %v1700 = vpop.permute.xlu0 %1699
        %1701 = vrot.lane.b32.xlu0 %v1670, 32
        %v1702 = vpop.permute.xlu0 %1701
        %vm1703 = vcmask 31744
        %v1705 = vsel %vm1703, %v405, %v663
        %v1707 = vsel %vm1703, %v406, %v665
        %v1709 = vsel %vm1703, %v407, %v667
        %v1711 = vsel %vm1703, %v408, %v669
        %v1713 = vsel %vm1703, %v409, %v671
        %v1715 = vsel %vm1703, %v410, %v673
        %v1717 = vsel %vm1703, %v411, %v675
        %v1719 = vsel %vm1703, %v412, %v677
        %v1721 = vsel %vm1703, %v413, %v679
        %v1723 = vsel %vm1703, %v414, %v681
        %v1725 = vsel %vm1703, %v415, %v683
        %v1727 = vsel %vm1703, %v416, %v685
        %v1729 = vsel %vm1703, %v417, %v687
        %v1731 = vsel %vm1703, %v418, %v689
        %v1733 = vsel %vm1703, %v419, %v691
        %v1735 = vsel %vm1703, %v420, %v693
        %vm1736 = vcmask 64512
        %v1738 = vsel %vm1736, %v1705, %v744
        %v1740 = vsel %vm1736, %v1707, %v746
        %v1742 = vsel %vm1736, %v1709, %v748
        %v1744 = vsel %vm1736, %v1711, %v750
        %v1746 = vsel %vm1736, %v1713, %v752
        %v1748 = vsel %vm1736, %v1715, %v754
        %v1750 = vsel %vm1736, %v1717, %v756
        %v1752 = vsel %vm1736, %v1719, %v758
        %v1754 = vsel %vm1736, %v1721, %v760
        %v1756 = vsel %vm1736, %v1723, %v762
        %v1758 = vsel %vm1736, %v1725, %v764
        %v1760 = vsel %vm1736, %v1727, %v766
        %v1762 = vsel %vm1736, %v1729, %v768
        %v1764 = vsel %vm1736, %v1731, %v770
        %v1766 = vsel %vm1736, %v1733, %v772
        %v1768 = vsel %vm1736, %v1735, %v774
        %vm1769 = vcmask 97280
        %v1771 = vsel %vm1769, %v1738, %v856
        %v1773 = vsel %vm1769, %v1740, %v858
        %v1775 = vsel %vm1769, %v1742, %v860
        %v1777 = vsel %vm1769, %v1744, %v862
        %v1779 = vsel %vm1769, %v1746, %v864
        %v1781 = vsel %vm1769, %v1748, %v866
        %v1783 = vsel %vm1769, %v1750, %v868
        %v1785 = vsel %vm1769, %v1752, %v870
        %v1787 = vsel %vm1769, %v1754, %v872
        %v1789 = vsel %vm1769, %v1756, %v874
        %v1791 = vsel %vm1769, %v1758, %v876
        %v1793 = vsel %vm1769, %v1760, %v878
        %v1795 = vsel %vm1769, %v1762, %v880
        %v1797 = vsel %vm1769, %v1764, %v882
        %v1799 = vsel %vm1769, %v1766, %v884
        %v1801 = vsel %vm1769, %v1768, %v886
        %vm1802 = vcmask 130048
        %v1804 = vsel %vm1802, %v1771, %v1128
        %v1806 = vsel %vm1802, %v1773, %v1130
        %v1808 = vsel %vm1802, %v1775, %v1132
        %v1810 = vsel %vm1802, %v1777, %v1134
        %v1812 = vsel %vm1802, %v1779, %v1136
        %v1814 = vsel %vm1802, %v1781, %v1138
        %v1816 = vsel %vm1802, %v1783, %v1140
        %v1818 = vsel %vm1802, %v1785, %v1142
        %v1820 = vsel %vm1802, %v1787, %v1144
        %v1822 = vsel %vm1802, %v1789, %v1146
        %v1824 = vsel %vm1802, %v1791, %v1148
        %v1826 = vsel %vm1802, %v1793, %v1150
        %v1828 = vsel %vm1802, %v1795, %v1152
        %v1830 = vsel %vm1802, %v1797, %v1154
        %v1832 = vsel %vm1802, %v1799, %v1156
        %v1834 = vsel %vm1802, %v1801, %v1158
        %vm1835 = vcmask 162816
        %v1837 = vsel %vm1835, %v1804, %v1208
        %v1839 = vsel %vm1835, %v1806, %v1210
        %v1841 = vsel %vm1835, %v1808, %v1212
        %v1843 = vsel %vm1835, %v1810, %v1214
        %v1845 = vsel %vm1835, %v1812, %v1216
        %v1847 = vsel %vm1835, %v1814, %v1218
        %v1849 = vsel %vm1835, %v1816, %v1220
        %v1851 = vsel %vm1835, %v1818, %v1222
        %v1853 = vsel %vm1835, %v1820, %v1224
        %v1855 = vsel %vm1835, %v1822, %v1226
        %v1857 = vsel %vm1835, %v1824, %v1228
        %v1859 = vsel %vm1835, %v1826, %v1230
        %v1861 = vsel %vm1835, %v1828, %v1232
        %v1863 = vsel %vm1835, %v1830, %v1234
        %v1865 = vsel %vm1835, %v1832, %v1236
        %v1867 = vsel %vm1835, %v1834, %v1238
        %vm1868 = vcmask 195584
        %v1870 = vsel %vm1868, %v1837, %v1320
        %v1872 = vsel %vm1868, %v1839, %v1322
        %v1874 = vsel %vm1868, %v1841, %v1324
        %v1876 = vsel %vm1868, %v1843, %v1326
        %v1878 = vsel %vm1868, %v1845, %v1328
        %v1880 = vsel %vm1868, %v1847, %v1330
        %v1882 = vsel %vm1868, %v1849, %v1332
        %v1884 = vsel %vm1868, %v1851, %v1334
        %v1886 = vsel %vm1868, %v1853, %v1336
        %v1888 = vsel %vm1868, %v1855, %v1338
        %v1890 = vsel %vm1868, %v1857, %v1340
        %v1892 = vsel %vm1868, %v1859, %v1342
        %v1894 = vsel %vm1868, %v1861, %v1344
        %v1896 = vsel %vm1868, %v1863, %v1346
        %v1898 = vsel %vm1868, %v1865, %v1348
        %v1900 = vsel %vm1868, %v1867, %v1350
        %vm1901 = vcmask 228352
        %v1903 = vsel %vm1901, %v1870, %v1592
        %v1905 = vsel %vm1901, %v1872, %v1594
        %v1907 = vsel %vm1901, %v1874, %v1596
        %v1909 = vsel %vm1901, %v1876, %v1598
        %v1911 = vsel %vm1901, %v1878, %v1600
        %v1913 = vsel %vm1901, %v1880, %v1602
        %v1915 = vsel %vm1901, %v1882, %v1604
        %v1917 = vsel %vm1901, %v1884, %v1606
        %v1919 = vsel %vm1901, %v1886, %v1608
        %v1921 = vsel %vm1901, %v1888, %v1610
        %v1923 = vsel %vm1901, %v1890, %v1612
        %v1925 = vsel %vm1901, %v1892, %v1614
        %v1927 = vsel %vm1901, %v1894, %v1616
        %v1929 = vsel %vm1901, %v1896, %v1618
        %v1931 = vsel %vm1901, %v1898, %v1620
        %v1933 = vsel %vm1901, %v1900, %v1622
        %vm1934 = vcmask 261120
        %v1936 = vsel %vm1934, %v1903, %v1672
        %v1938 = vsel %vm1934, %v1905, %v1674
        %v1940 = vsel %vm1934, %v1907, %v1676
        %v1942 = vsel %vm1934, %v1909, %v1678
        %v1944 = vsel %vm1934, %v1911, %v1680
        %v1946 = vsel %vm1934, %v1913, %v1682
        %v1948 = vsel %vm1934, %v1915, %v1684
        %v1950 = vsel %vm1934, %v1917, %v1686
        %v1952 = vsel %vm1934, %v1919, %v1688
        %v1954 = vsel %vm1934, %v1921, %v1690
        %v1956 = vsel %vm1934, %v1923, %v1692
        %v1958 = vsel %vm1934, %v1925, %v1694
        %v1960 = vsel %vm1934, %v1927, %v1696
        %v1962 = vsel %vm1934, %v1929, %v1698
        %v1964 = vsel %vm1934, %v1931, %v1700
        %v1966 = vsel %vm1934, %v1933, %v1702
        %vm1967 = vcmask 293888
        %v1969 = vsel %vm1967, %v1936, 0
        %v1970 = vsel %vm1967, %v1938, 0
        %v1971 = vsel %vm1967, %v1940, 0
        %v1972 = vsel %vm1967, %v1942, 0
        %v1973 = vsel %vm1967, %v1944, 0
        %v1974 = vsel %vm1967, %v1946, 0
        %v1975 = vsel %vm1967, %v1948, 0
        %v1976 = vsel %vm1967, %v1950, 0
        %v1977 = vsel %vm1967, %v1952, 0
        %v1978 = vsel %vm1967, %v1954, 0
        %v1979 = vsel %vm1967, %v1956, 0
        %v1980 = vsel %vm1967, %v1958, 0
        %v1981 = vsel %vm1967, %v1960, 0
        %v1982 = vsel %vm1967, %v1962, 0
        %v1983 = vsel %vm1967, %v1964, 0
        %v1984 = vsel %vm1967, %v1966, 0
        %v1985 = vld [vmem:[%s1] sm:$0xf]
        %v1986 = vld [vmem:[%s1 + $0x4] sm:$0xf]
        %v1987 = vld [vmem:[%s1 + $0x8] sm:$0xf]
        %v1988 = vld [vmem:[%s1 + $0xc] sm:$0xf]
        %v1989 = vld [vmem:[%s1 + $0x10] sm:$0xf]
        %v1990 = vld [vmem:[%s1 + $0x14] sm:$0xf]
        %v1991 = vld [vmem:[%s2] sm:$0x1]
        %v1993 = vlaneseq
        %v1994 = vshrl.u32 %v1993, 7
        %v1995 = vsub.s32 0, %v1994
        %v1996 = vrot.slane %v1991, %v1995
        %v2004 = vunpack.c.l.b16 %v1985
        %v2005 = vunpack.c.l.b16 %v1986
        %v2006 = vunpack.c.l.b16 %v1987
        %v2007 = vunpack.c.l.b16 %v1988
        %v2008 = vunpack.c.l.b16 %v1989
        %v2009 = vunpack.c.l.b16 %v1990
        %v2010 = vpack.c.b16 %v2005, %v2004
        %v2011 = vpack.c.b16 %v2007, %v2006
        %v2012 = vpack.c.b16 %v2009, %v2008
        %vm2016 = vcmask 392192
        %v2017 = vsel %vm2016, %v1969, 0
        %v2019 = vsel %vm2016, %v1970, 0
        %v2021 = vsel %vm2016, %v1971, 0
        %v2023 = vsel %vm2016, %v1972, 0
        %v2025 = vsel %vm2016, %v1973, 0
        %v2027 = vsel %vm2016, %v1974, 0
        %v2029 = vsel %vm2016, %v1975, 0
        %v2031 = vsel %vm2016, %v1976, 0
        %v2033 = vsel %vm2016, %v1977, 0
        %v2035 = vsel %vm2016, %v1978, 0
        %v2037 = vsel %vm2016, %v1979, 0
        %v2039 = vsel %vm2016, %v1980, 0
        %v2041 = vsel %vm2016, %v1981, 0
        %v2043 = vsel %vm2016, %v1982, 0
        %v2045 = vsel %vm2016, %v1983, 0
        %v2047 = vsel %vm2016, %v1984, 0
        %2049 = vmatprep.subr.bf16.mxu0 0
        %2050 = vmatpush1.bf16.msra.mxu0 %v2010
        %2051 = vmatprep.subr.bf16.mxu0 0
        %2052 = vmatpush1.bf16.msra.mxu0 %v2011
        %2053 = vmatprep.subr.bf16.mxu0 0
        %2054 = vmatpush1.bf16.msra.mxu0 %v2012
        %2055 = vmatprep.subr.bf16.mxu0 0
        %2056 = vmatpush1.bf16.msra.mxu0 0
        %2057 = vmatprep.subr.bf16.mxu0 0
        %2058 = vmatpush1.bf16.msra.mxu0 0
        %2059 = vmatprep.subr.bf16.mxu0 0
        %2060 = vmatpush1.bf16.msra.mxu0 0
        %2061 = vmatprep.subr.bf16.mxu0 0
        %2062 = vmatpush1.bf16.msra.mxu0 0
        %2063 = vmatprep.subr.bf16.mxu0 0
        %2064 = vmatpush1.bf16.msra.mxu0 0
        %2065 = vmatprep.subr.bf16.mxu0 0
        %2066 = vmatpush1.bf16.msra.mxu0 0
        %2067 = vmatprep.subr.bf16.mxu0 0
        %2068 = vmatpush1.bf16.msra.mxu0 0
        %2069 = vmatprep.subr.bf16.mxu0 0
        %2070 = vmatpush1.bf16.msra.mxu0 0
        %2071 = vmatprep.subr.bf16.mxu0 0
        %2072 = vmatpush1.bf16.msra.mxu0 0
        %2073 = vmatprep.subr.bf16.mxu0 0
        %2074 = vmatpush1.bf16.msra.mxu0 0
        %2075 = vmatprep.subr.bf16.mxu0 0
        %2076 = vmatpush1.bf16.msra.mxu0 0
        %2077 = vmatprep.subr.bf16.mxu0 0
        %2078 = vmatpush1.bf16.msra.mxu0 0
        %2079 = vmatprep.subr.bf16.mxu0 0
        %2080 = vmatpush1.bf16.msra.mxu0 0
        %2081 = vmatprep.mubr.bf16.mxu0 0
        %2082 = vmatmul.mubr.bf16.gmra.mrb[0].mxu0 %v2017
        %v2083 = vpop.f32.mrb[0].mxu0
        %v2084 = vadd.f32 %v1996, %v2083
        %v2085 = vpop.f32.mrb[0].mxu0
        %v2086 = vpop.f32.mrb[0].mxu0
        %v2087 = vadd.f32 %v1996, %v2086
        %v2088 = vpop.f32.mrb[0].mxu0
        %2089 = vmatprep.mubr.bf16.mxu0 0
        %2090 = vmatmul.mubr.bf16.gmra.mrb[0].mxu0 %v2019
        %v2091 = vpop.f32.mrb[0].mxu0
        %v2092 = vadd.f32 %v1996, %v2091
        %v2093 = vpop.f32.mrb[0].mxu0
        %v2094 = vpop.f32.mrb[0].mxu0
        %v2095 = vadd.f32 %v1996, %v2094
        %v2096 = vpop.f32.mrb[0].mxu0
        %2097 = vmatprep.mubr.bf16.mxu0 0
        %2098 = vmatmul.mubr.bf16.gmra.mrb[0].mxu0 %v2021
        %v2099 = vpop.f32.mrb[0].mxu0
        %v2100 = vadd.f32 %v1996, %v2099
        %v2101 = vpop.f32.mrb[0].mxu0
        %v2102 = vpop.f32.mrb[0].mxu0
        %v2103 = vadd.f32 %v1996, %v2102
        %v2104 = vpop.f32.mrb[0].mxu0
        %2105 = vmatprep.mubr.bf16.mxu0 0
        %2106 = vmatmul.mubr.bf16.gmra.mrb[0].mxu0 %v2023
        %v2107 = vpop.f32.mrb[0].mxu0
        %v2108 = vadd.f32 %v1996, %v2107
        %v2109 = vpop.f32.mrb[0].mxu0
        %v2110 = vpop.f32.mrb[0].mxu0
        %v2111 = vadd.f32 %v1996, %v2110
        %v2112 = vpop.f32.mrb[0].mxu0
        %2113 = vmatprep.mubr.bf16.mxu0 0
        %2114 = vmatmul.mubr.bf16.gmra.mrb[0].mxu0 %v2025
        %v2115 = vpop.f32.mrb[0].mxu0
        %v2116 = vadd.f32 %v1996, %v2115
        %v2117 = vpop.f32.mrb[0].mxu0
        %v2118 = vpop.f32.mrb[0].mxu0
        %v2119 = vadd.f32 %v1996, %v2118
        %v2120 = vpop.f32.mrb[0].mxu0
        %2121 = vmatprep.mubr.bf16.mxu0 0
        %2122 = vmatmul.mubr.bf16.gmra.mrb[0].mxu0 %v2027
        %v2123 = vpop.f32.mrb[0].mxu0
        %v2124 = vadd.f32 %v1996, %v2123
        %v2125 = vpop.f32.mrb[0].mxu0
        %v2126 = vpop.f32.mrb[0].mxu0
        %v2127 = vadd.f32 %v1996, %v2126
        %v2128 = vpop.f32.mrb[0].mxu0
        %2129 = vmatprep.mubr.bf16.mxu0 0
        %2130 = vmatmul.mubr.bf16.gmra.mrb[0].mxu0 %v2029
        %v2131 = vpop.f32.mrb[0].mxu0
        %v2132 = vadd.f32 %v1996, %v2131
        %v2133 = vpop.f32.mrb[0].mxu0
        %v2134 = vpop.f32.mrb[0].mxu0
        %v2135 = vadd.f32 %v1996, %v2134
        %v2136 = vpop.f32.mrb[0].mxu0
        %2137 = vmatprep.mubr.bf16.mxu0 0
        %2138 = vmatmul.mubr.bf16.gmra.mrb[0].mxu0 %v2031
        %v2139 = vpop.f32.mrb[0].mxu0
        %v2140 = vadd.f32 %v1996, %v2139
        %v2141 = vpop.f32.mrb[0].mxu0
        %v2142 = vpop.f32.mrb[0].mxu0
        %v2143 = vadd.f32 %v1996, %v2142
        %v2144 = vpop.f32.mrb[0].mxu0
        %2145 = vmatprep.mubr.bf16.mxu0 0
        %2146 = vmatmul.mubr.bf16.gmra.mrb[0].mxu0 %v2033
        %v2147 = vpop.f32.mrb[0].mxu0
        %v2148 = vadd.f32 %v1996, %v2147
        %v2149 = vpop.f32.mrb[0].mxu0
        %v2150 = vpop.f32.mrb[0].mxu0
        %v2151 = vadd.f32 %v1996, %v2150
        %v2152 = vpop.f32.mrb[0].mxu0
        %2153 = vmatprep.mubr.bf16.mxu0 0
        %2154 = vmatmul.mubr.bf16.gmra.mrb[0].mxu0 %v2035
        %v2155 = vpop.f32.mrb[0].mxu0
        %v2156 = vadd.f32 %v1996, %v2155
        %v2157 = vpop.f32.mrb[0].mxu0
        %v2158 = vpop.f32.mrb[0].mxu0
        %v2159 = vadd.f32 %v1996, %v2158
        %v2160 = vpop.f32.mrb[0].mxu0
        %2161 = vmatprep.mubr.bf16.mxu0 0
        %2162 = vmatmul.mubr.bf16.gmra.mrb[0].mxu0 %v2037
        %v2163 = vpop.f32.mrb[0].mxu0
        %v2164 = vadd.f32 %v1996, %v2163
        %v2165 = vpop.f32.mrb[0].mxu0
        %v2166 = vpop.f32.mrb[0].mxu0
        %v2167 = vadd.f32 %v1996, %v2166
        %v2168 = vpop.f32.mrb[0].mxu0
        %2169 = vmatprep.mubr.bf16.mxu0 0
        %2170 = vmatmul.mubr.bf16.gmra.mrb[0].mxu0 %v2039
        %v2171 = vpop.f32.mrb[0].mxu0
        %v2172 = vadd.f32 %v1996, %v2171
        %v2173 = vpop.f32.mrb[0].mxu0
        %v2174 = vpop.f32.mrb[0].mxu0
        %v2175 = vadd.f32 %v1996, %v2174
        %v2176 = vpop.f32.mrb[0].mxu0
        %2177 = vmatprep.mubr.bf16.mxu0 0
        %2178 = vmatmul.mubr.bf16.gmra.mrb[0].mxu0 %v2041
        %v2179 = vpop.f32.mrb[0].mxu0
        %v2180 = vadd.f32 %v1996, %v2179
        %v2181 = vpop.f32.mrb[0].mxu0
        %v2182 = vpop.f32.mrb[0].mxu0
        %v2183 = vadd.f32 %v1996, %v2182
        %v2184 = vpop.f32.mrb[0].mxu0
        %2185 = vmatprep.mubr.bf16.mxu0 0
        %2186 = vmatmul.mubr.bf16.gmra.mrb[0].mxu0 %v2043
        %v2187 = vpop.f32.mrb[0].mxu0
        %v2188 = vadd.f32 %v1996, %v2187
        %v2189 = vpop.f32.mrb[0].mxu0
        %v2190 = vpop.f32.mrb[0].mxu0
        %v2191 = vadd.f32 %v1996, %v2190
        %v2192 = vpop.f32.mrb[0].mxu0
        %2193 = vmatprep.mubr.bf16.mxu0 0
        %2194 = vmatmul.mubr.bf16.gmra.mrb[0].mxu0 %v2045
        %v2195 = vpop.f32.mrb[0].mxu0
        %v2196 = vadd.f32 %v1996, %v2195
        %v2197 = vpop.f32.mrb[0].mxu0
        %v2198 = vpop.f32.mrb[0].mxu0
        %v2199 = vadd.f32 %v1996, %v2198
        %v2200 = vpop.f32.mrb[0].mxu0
        %2201 = vmatprep.mubr.bf16.mxu0 0
        %2202 = vmatmul.mubr.bf16.gmra.mrb[0].mxu0 %v2047
        %v2203 = vpop.f32.mrb[0].mxu0
        %v2204 = vadd.f32 %v1996, %v2203
        %v2205 = vpop.f32.mrb[0].mxu0
        %v2206 = vpop.f32.mrb[0].mxu0
        %v2207 = vadd.f32 %v1996, %v2206
        %v2208 = vpop.f32.mrb[0].mxu0
        %2209 = vdwg.mxu0
        %2210 = vst [vmem:[%s177] sm:$0xff] %v2084
        %2211 = vst [vmem:[%s177 + $0x8] sm:$0xff] %v2087
        %2212 = vst [vmem:[%s177 + $0x10] sm:$0xff] %v2092
        %2213 = vst [vmem:[%s177 + $0x18] sm:$0xff] %v2095
        %2214 = vst [vmem:[%s177 + $0x20] sm:$0xff] %v2100
        %2215 = vst [vmem:[%s177 + $0x28] sm:$0xff] %v2103
        %2216 = vst [vmem:[%s177 + $0x30] sm:$0xff] %v2108
        %2217 = vst [vmem:[%s177 + $0x38] sm:$0xff] %v2111
        %2218 = vst [vmem:[%s177 + $0x40] sm:$0xff] %v2116
        %2219 = vst [vmem:[%s177 + $0x48] sm:$0xff] %v2119
        %2220 = vst [vmem:[%s177 + $0x50] sm:$0xff] %v2124
        %2221 = vst [vmem:[%s177 + $0x58] sm:$0xff] %v2127
        %2222 = vst [vmem:[%s177 + $0x60] sm:$0xff] %v2132
        %2223 = vst [vmem:[%s177 + $0x68] sm:$0xff] %v2135
        %2224 = vst [vmem:[%s177 + $0x70] sm:$0xff] %v2140
        %2225 = vst [vmem:[%s177 + $0x78] sm:$0xff] %v2143
        %2226 = vst [vmem:[%s177 + $0x80] sm:$0xff] %v2148
        %2227 = vst [vmem:[%s177 + $0x88] sm:$0xff] %v2151
        %2228 = vst [vmem:[%s177 + $0x90] sm:$0xff] %v2156
        %2229 = vst [vmem:[%s177 + $0x98] sm:$0xff] %v2159
        %2230 = vst [vmem:[%s177 + $0xa0] sm:$0xff] %v2164
        %2231 = vst [vmem:[%s177 + $0xa8] sm:$0xff] %v2167
        %2232 = vst [vmem:[%s177 + $0xb0] sm:$0xff] %v2172
        %2233 = vst [vmem:[%s177 + $0xb8] sm:$0xff] %v2175
        %2234 = vst [vmem:[%s177 + $0xc0] sm:$0xff] %v2180
        %2235 = vst [vmem:[%s177 + $0xc8] sm:$0xff] %v2183
        %2236 = vst [vmem:[%s177 + $0xd0] sm:$0xff] %v2188
        %2237 = vst [vmem:[%s177 + $0xd8] sm:$0xff] %v2191
        %2238 = vst [vmem:[%s177 + $0xe0] sm:$0xff] %v2196
        %2239 = vst [vmem:[%s177 + $0xe8] sm:$0xff] %v2199
        %2240 = vst [vmem:[%s177 + $0xf0] sm:$0xff] %v2204
        %2241 = vst [vmem:[%s177 + $0xf8] sm:$0xff] %v2207
        %s2242 = sand.u32 %s107, 1
        %s2243 = scalar_lea.sflag [#allocation3], %s2242
        %s2244 = sand.u32 %s107, 1
        %s2245 = smul.addr %s2244, 256
        %s2246 = scalar_lea.vmem [#allocation2], %s2245
        // Predicated region
        $region33: #{tpu_custom_call.1} parent=31 // pred_check
          %p2247 = pneg %p117
        $region34: #{tpu_custom_call.1} parent=31 // pred_check_branch
          %2249 = sbr.rel (%p2247) target = $region36
        $region35: #{tpu_custom_call.1} parent=31 // pred_region
          %s2250 = smul.u32 32, %s22
          %s2252 = ssub.s32 4096, 4096
          %2253 = vsyncadd %s2243, %s2252
          %s2254 = smul.addr %s21, 32
          %s2255 = sadd.s32 %s2250, %s2254
          %s2256 = smul.addr %s2255, 128
          %s2257 = scalar_lea.hbm %s3, %s2256
          %s2258 = sshll.u32 %s2246, 4
          %s2259 = int_to_ptr.vmem [resolvable:$true] %s2258
          %2264 = dma.vmem_to_hbm [thread:$0]  %s2259, 4096, %s2257, %s2243, 128, 128, 8
        $region36: #{tpu_custom_call.1} parent=31 // pred_fallthru
          _
      $region32: #{tpu_custom_call.1} parent=5 // pred_fallthru
        _
      %p2265 = scmp.le.s32.totalorder 2, %s12
      // Predicated region
      $region37: #{tpu_custom_call.1} parent=5 // pred_check
        %p2266 = pneg %p2265
      $region38: #{tpu_custom_call.1} parent=5 // pred_check_branch
        %2268 = sbr.rel (%p2266) target = $region40
      $region39: #{tpu_custom_call.1} parent=5 // pred_region
        %s2269 = ssub.s32 %s12, 2
        // Predicated region
        $region41: #{tpu_custom_call.1} parent=39 // pred_check
          %p2270 = pneg %p123
        $region42: #{tpu_custom_call.1} parent=39 // pred_check_branch
          %2272 = sbr.rel (%p2270) target = $region44
        $region43: #{tpu_custom_call.1} parent=39 // pred_region
          %s2273 = sand.u32 %s108, 1
          %s2274 = scalar_lea.sflag [#allocation3], %s2273
          %s2275 = sand.u32 %s108, 1
          %s2276 = smul.addr %s2275, 256
          %s2277 = scalar_lea.vmem [#allocation2], %s2276
          %2278 = dma.done %s2274, 4096
        $region44: #{tpu_custom_call.1} parent=39 // pred_fallthru
          _
      $region40: #{tpu_custom_call.1} parent=5 // pred_fallthru
        _
    $region6: #{tpu_custom_call.1} parent=1 // loop_footer
      %s16 = sadd.s32 1, %s12
    $region7: #{tpu_custom_call.1} parent=1 // loop_footer_branch
      %11 = sbr.rel target = $region3
    $region8: #{tpu_custom_call.1} parent=1 // loop_exit
      _
    %2279 = vsyncpa [#allocation3], 1
    %s2280 = scalar_lea.sflag [#allocation3], 1
    %2281 = vsyncpa %s2280, 1

</llo_original>
